<compile_context>
chip_gen: v7x
topology: tpu7x:2x2x1
jax: 0.10.0
libtpu: 0.0.40
codegen_flags: <defaults>
</compile_context>

<pallas_src>
import math
from functools import partial

import jax
import jax.numpy as jnp
from jax import lax
from jax.experimental import pallas as pl
from jax.experimental.pallas import tpu as pltpu


# ----------------------------- in-kernel helpers -----------------------------

def _layernorm(z, gamma, beta, d_model, eps):
    """Reference LayerNorm: torch.std is unbiased (/(D-1)); normalizer is (std+eps).
    The divide is a reciprocal (EUP slot) + VPU mul, free filler under the MXU."""
    mean = jnp.mean(z, axis=-1, keepdims=True)
    diff = z - mean
    var = jnp.sum(diff * diff, axis=-1, keepdims=True) * (1.0 / (d_model - 1))
    std = jnp.sqrt(var)
    return gamma * (diff * pl.reciprocal(std + eps, approx=False)) + beta


def _prefer_bf16_exp():
    """bf16 EUP path exists on v6e/v7x; keep exp in f32 on v5e and older."""
    try:
        kind = jax.devices()[0].device_kind.lower()
    except Exception:
        return True
    return not any(t in kind for t in ("v2", "v3", "v4", "v5"))


def _per_step_vmem_bytes(S, D, F):
    """Rough per-grid-step VMEM working set for the fused kernel."""
    weights = 2 * (D * D + 2 * D * F)              # bf16, single-buffered (Buffered(1))
    io = 2 * 2 * S * D * 4                         # x + out blocks, double-buffered
    interm = S * S * 8 + S * F * 4 + 6 * S * D * 4  # scores/p (one head), hidden, temps
    vecs = 4 * (2 * F + 12 * D)
    return weights + io + interm + vecs


# ----------------------------- fused encoder-layer kernel -----------------------------

def _encoder_layer_kernel(x_ref, wc_ref, g1_ref, b1_ref,
                          w1_ref, b1c_ref, w2_ref, b2c_ref,
                          gff_ref, bff_ref, g2_ref, b2_ref,
                          o_ref, *, num_heads, d_model, eps, scale, bf16_exp):
    x = x_ref[...]                                  # [S, D] f32 (residual for norm1)
    xb = x.astype(jnp.bfloat16)                     # MXU operand; q = k = v = raw x
    dk = d_model // num_heads

    # ---- multi-head self-attention fused with the w_concat projection ----
    # Each head's context is projected through the matching row-slice of
    # w_concat and accumulated -> the "concat" never materializes.
    y = jnp.zeros_like(x)                           # f32 [S, D]
    for h in range(num_heads):                      # static unroll; heads are few
        xh = xb[:, h * dk:(h + 1) * dk]             # [S, dk] bf16
        # q @ k^T without a materialized transpose.
        s = lax.dot_general(xh, xh, (((1,), (1,)), ((), ())),
                            preferred_element_type=jnp.float32) * scale
        s = s - jnp.max(s, axis=-1, keepdims=True)
        if bf16_exp:
            # exp on the packed bf16 EUP path; row-sum/reciprocal stay f32.
            p = jnp.exp(s.astype(jnp.bfloat16))
            denom = jnp.sum(p.astype(jnp.float32), axis=-1, keepdims=True)
        else:
            pf = jnp.exp(s)
            denom = jnp.sum(pf, axis=-1, keepdims=True)
            p = pf.astype(jnp.bfloat16)
        inv = pl.reciprocal(denom, approx=False)    # exact, per review concern
        # (p @ v) * (1/sum) == softmax(p) @ v ; the per-row scale is cheaper on [S, dk].
        ctx_h = (jnp.dot(p, xh, preferred_element_type=jnp.float32) * inv
                 ).astype(jnp.bfloat16)
        y = y + jnp.dot(ctx_h, wc_ref[h * dk:(h + 1) * dk, :],
                        preferred_element_type=jnp.float32)

    # ---- residual + norm1 ----
    x1 = _layernorm(y + x, g1_ref[...], b1_ref[...], d_model, eps)

    # ---- positionwise FFN (conv1 -> ReLU -> conv2) + internal residual/LN_ff ----
    h1 = jnp.dot(x1.astype(jnp.bfloat16), w1_ref[...],
                 preferred_element_type=jnp.float32) + b1c_ref[...]
    h1 = jnp.maximum(h1, 0.0)
    t = jnp.dot(h1.astype(jnp.bfloat16), w2_ref[...],
                preferred_element_type=jnp.float32) + b2c_ref[...]
    u = _layernorm(t + x1, gff_ref[...], bff_ref[...], d_model, eps)
    # ---- EncoderLayer's norm2 with the second residual (dropout = identity) ----
    o_ref[...] = _layernorm(u + x1, g2_ref[...], b2_ref[...], d_model, eps)


def encoder_layer_forward(x, src_mask, params, num_heads, eps=1e-6):
    """Faithful to EncoderLayer.forward (dropout layers are identity)."""
    # TODO(synk): masked_fill_ (src_mask is not None) path not implemented.
    assert src_mask is None
    B, S, D = x.shape
    assert D % num_heads == 0
    F = params["w1"].shape[1]
    dk = D // num_heads

    est = _per_step_vmem_bytes(S, D, F)
    # TODO(synk): flash-style KV tiling + token-tiled FFN fallback for long S.
    assert est <= 48 * 1024 * 1024, "sequence too long for the fully fused kernel"
    vmem_limit = int(min(60 << 20, max(16 << 20, 2 * est)))

    kernel = partial(_encoder_layer_kernel, num_heads=num_heads, d_model=D,
                     eps=eps, scale=1.0 / math.sqrt(dk),
                     bf16_exp=_prefer_bf16_exp())

    def _resident(shape):
        # Constant-index block: resident in VMEM for the whole grid;
        # Buffered(1) avoids the default (wasteful) double buffer.
        return pl.BlockSpec(shape, lambda b: (0,) * len(shape),
                            pipeline_mode=pl.Buffered(1))

    return pl.pallas_call(
        kernel,
        out_shape=jax.ShapeDtypeStruct((B, S, D), jnp.float32),
        grid=(B,),
        in_specs=[
            pl.BlockSpec((None, S, D), lambda b: (b, 0, 0)),   # x (f32)
            _resident((D, D)),                                 # w_concat (bf16)
            _resident((1, D)), _resident((1, D)),              # norm1 gamma / beta
            _resident((D, F)), _resident((1, F)),              # w1 (bf16), conv1 bias
            _resident((F, D)), _resident((1, D)),              # w2 (bf16), conv2 bias
            _resident((1, D)), _resident((1, D)),              # LN_ff gamma / beta
            _resident((1, D)), _resident((1, D)),              # norm2 gamma / beta
        ],
        out_specs=pl.BlockSpec((None, S, D), lambda b: (b, 0, 0)),
        compiler_params=pltpu.CompilerParams(
            dimension_semantics=("parallel",),
            vmem_limit_bytes=vmem_limit),
        cost_estimate=pl.CostEstimate(
            flops=B * S * (4 * S * D + 2 * D * D + 4 * D * F),
            transcendentals=B * num_heads * S * S + 3 * B * S,
            bytes_accessed=B * S * D * 8 + 2 * (D * D + 2 * D * F)
                           + 4 * (F + 9 * D)),
    )(x,
      params["w_concat"],
      params["g1"].reshape(1, D), params["b1"].reshape(1, D),
      params["w1"], params["b1_conv"].reshape(1, F),
      params["w2"], params["b2_conv"].reshape(1, D),
      params["ln_ff_g"].reshape(1, D), params["ln_ff_b"].reshape(1, D),
      params["g2"].reshape(1, D), params["b2"].reshape(1, D))


# ----------------------------- parameter init -----------------------------

def init_params(key, d_model, d_ff):
    k0, k1, k2 = jax.random.split(key, 3)
    s = 0.05
    return dict(
        # weights stored bf16 (MXU inputs); biases / LayerNorm params stay f32
        w_concat=(s * jax.random.normal(k0, (d_model, d_model), jnp.float32)).astype(jnp.bfloat16),
        w1=(s * jax.random.normal(k1, (d_model, d_ff), jnp.float32)).astype(jnp.bfloat16),
        b1_conv=jnp.zeros((d_ff,), jnp.float32),
        w2=(s * jax.random.normal(k2, (d_ff, d_model), jnp.float32)).astype(jnp.bfloat16),
        b2_conv=jnp.zeros((d_model,), jnp.float32),
        # norm1
        g1=jnp.ones((d_model,), jnp.float32), b1=jnp.zeros((d_model,), jnp.float32),
        # LayerNorm inside PositionwiseFeedForward (layer3)
        ln_ff_g=jnp.ones((d_model,), jnp.float32), ln_ff_b=jnp.zeros((d_model,), jnp.float32),
        # norm2
        g2=jnp.ones((d_model,), jnp.float32), b2=jnp.zeros((d_model,), jnp.float32),
    )


# ----------------------------- main -----------------------------

if __name__ == "__main__":
    # Small shapes consistent with the module; d_model a multiple of 128 so the
    # per-head slices are lane-dense (d_k = 128).
    B = 2
    S = 16
    D_MODEL = 256
    D_FF = 512
    NUM_HEADS = 2

    key = jax.random.PRNGKey(0)
    k_par, k_x = jax.random.split(key)

    params = init_params(k_par, D_MODEL, D_FF)
    x = jax.random.normal(k_x, (B, S, D_MODEL), jnp.float32)
    src_mask = None

    fwd = jax.jit(partial(encoder_layer_forward, num_heads=NUM_HEADS))
    out = fwd(x, src_mask, params)
    out = jax.block_until_ready(out)

    assert out.shape == (B, S, D_MODEL)
    assert bool(jnp.all(jnp.isfinite(out)))
    print("KERNEL_OK")
</pallas_src>

<mosaic_0001>
module attributes {stable_mosaic.version = 11 : i64} {
  func.func @_encoder_layer_kernel(%arg0: i32, %arg1: memref<1x16x256xf32, #tpu.memory_space<vmem>>, %arg2: memref<256x256xbf16, #tpu.memory_space<vmem>>, %arg3: memref<1x256xf32, #tpu.memory_space<vmem>>, %arg4: memref<1x256xf32, #tpu.memory_space<vmem>>, %arg5: memref<256x512xbf16, #tpu.memory_space<vmem>>, %arg6: memref<1x512xf32, #tpu.memory_space<vmem>>, %arg7: memref<512x256xbf16, #tpu.memory_space<vmem>>, %arg8: memref<1x256xf32, #tpu.memory_space<vmem>>, %arg9: memref<1x256xf32, #tpu.memory_space<vmem>>, %arg10: memref<1x256xf32, #tpu.memory_space<vmem>>, %arg11: memref<1x256xf32, #tpu.memory_space<vmem>>, %arg12: memref<1x256xf32, #tpu.memory_space<vmem>>, %arg13: memref<1x16x256xf32, #tpu.memory_space<vmem>>) attributes {dimension_semantics = [#tpu.dimension_semantics<parallel>], iteration_bounds = array<i64: 2>, scalar_prefetch = 0 : i64, scratch_operands = 0 : i64, tpu.core_type = #tpu.core_type<tc>, window_params = [{transform_indices = @transform_0, window_bounds = array<i64: 1, 16, 256>}, {pipeline_mode = #tpu.pipeline_mode<synchronous>, transform_indices = @transform_1, window_bounds = array<i64: 256, 256>}, {pipeline_mode = #tpu.pipeline_mode<synchronous>, transform_indices = @transform_2, window_bounds = array<i64: 1, 256>}, {pipeline_mode = #tpu.pipeline_mode<synchronous>, transform_indices = @transform_3, window_bounds = array<i64: 1, 256>}, {pipeline_mode = #tpu.pipeline_mode<synchronous>, transform_indices = @transform_4, window_bounds = array<i64: 256, 512>}, {pipeline_mode = #tpu.pipeline_mode<synchronous>, transform_indices = @transform_5, window_bounds = array<i64: 1, 512>}, {pipeline_mode = #tpu.pipeline_mode<synchronous>, transform_indices = @transform_6, window_bounds = array<i64: 512, 256>}, {pipeline_mode = #tpu.pipeline_mode<synchronous>, transform_indices = @transform_7, window_bounds = array<i64: 1, 256>}, {pipeline_mode = #tpu.pipeline_mode<synchronous>, transform_indices = @transform_8, window_bounds = array<i64: 1, 256>}, {pipeline_mode = #tpu.pipeline_mode<synchronous>, transform_indices = @transform_9, window_bounds = array<i64: 1, 256>}, {pipeline_mode = #tpu.pipeline_mode<synchronous>, transform_indices = @transform_10, window_bounds = array<i64: 1, 256>}, {pipeline_mode = #tpu.pipeline_mode<synchronous>, transform_indices = @transform_11, window_bounds = array<i64: 1, 256>}, {transform_indices = @transform_12, window_bounds = array<i64: 1, 16, 256>}]} {
    %c0 = arith.constant 0 : index
    %c0_0 = arith.constant 0 : index
    %c0_1 = arith.constant 0 : index
    %0 = vector.load %arg1[%c0, %c0_0, %c0_1] : memref<1x16x256xf32, #tpu.memory_space<vmem>>, vector<1x16x256xf32>
    %1 = vector.shape_cast %0 : vector<1x16x256xf32> to vector<16x256xf32>
    %2 = arith.truncf %1 : vector<16x256xf32> to vector<16x256xbf16>
    %cst = arith.constant 0.000000e+00 : f32
    %3 = vector.broadcast %cst : f32 to vector<16x256xf32>
    %4 = vector.extract_strided_slice %2 {offsets = [0, 0], sizes = [16, 128], strides = [1, 1]} : vector<16x256xbf16> to vector<16x128xbf16>
    %cst_2 = arith.constant dense<0.000000e+00> : vector<16x16xf32>
    %5 = tpu.matmul %4, %4, %cst_2 {dimension_numbers = #tpu.dot_dimension_numbers<[1], [1], [0], [0], [0, 0, 1, 0], [], []>} : vector<16x128xbf16>, vector<16x128xbf16>, vector<16x16xf32> -> vector<16x16xf32>
    %cst_3 = arith.constant 0.0883883461 : f32
    %6 = vector.broadcast %cst_3 : f32 to vector<16x16xf32>
    %7 = arith.mulf %5, %6 : vector<16x16xf32>
    %cst_4 = arith.constant dense<0xFF800000> : vector<16xf32>
    %8 = vector.multi_reduction <maximumf>, %7, %cst_4 [1] : vector<16x16xf32> to vector<16xf32>
    %9 = vector.shape_cast %8 : vector<16xf32> to vector<16x1xf32>
    %10 = vector.broadcast %9 : vector<16x1xf32> to vector<16x16xf32>
    %11 = arith.subf %7, %10 : vector<16x16xf32>
    %12 = arith.truncf %11 : vector<16x16xf32> to vector<16x16xbf16>
    %13 = math.exp %12 : vector<16x16xbf16>
    %14 = arith.extf %13 : vector<16x16xbf16> to vector<16x16xf32>
    %cst_5 = arith.constant dense<0.000000e+00> : vector<16xf32>
    %15 = vector.multi_reduction <add>, %14, %cst_5 [1] : vector<16x16xf32> to vector<16xf32>
    %16 = vector.shape_cast %15 : vector<16xf32> to vector<16x1xf32>
    %17 = tpu.reciprocal %16 : vector<16x1xf32> -> vector<16x1xf32>
    %cst_6 = arith.constant dense<0.000000e+00> : vector<16x128xf32>
    %18 = tpu.matmul %13, %4, %cst_6 {dimension_numbers = #tpu.dot_dimension_numbers<[1], [0], [0], [1], [0, 0, 1, 1], [], []>} : vector<16x16xbf16>, vector<16x128xbf16>, vector<16x128xf32> -> vector<16x128xf32>
    %19 = vector.broadcast %17 : vector<16x1xf32> to vector<16x128xf32>
    %20 = arith.mulf %18, %19 : vector<16x128xf32>
    %21 = arith.truncf %20 : vector<16x128xf32> to vector<16x128xbf16>
    %c0_7 = arith.constant 0 : index
    %c0_8 = arith.constant 0 : index
    %22 = vector.load %arg2[%c0_7, %c0_8] : memref<256x256xbf16, #tpu.memory_space<vmem>>, vector<128x256xbf16>
    %cst_9 = arith.constant dense<0.000000e+00> : vector<16x256xf32>
    %23 = tpu.matmul %21, %22, %cst_9 {dimension_numbers = #tpu.dot_dimension_numbers<[1], [0], [0], [1], [0, 0, 1, 1], [], []>} : vector<16x128xbf16>, vector<128x256xbf16>, vector<16x256xf32> -> vector<16x256xf32>
    %24 = arith.addf %3, %23 : vector<16x256xf32>
    %25 = vector.extract_strided_slice %2 {offsets = [0, 128], sizes = [16, 128], strides = [1, 1]} : vector<16x256xbf16> to vector<16x128xbf16>
    %cst_10 = arith.constant dense<0.000000e+00> : vector<16x16xf32>
    %26 = tpu.matmul %25, %25, %cst_10 {dimension_numbers = #tpu.dot_dimension_numbers<[1], [1], [0], [0], [0, 0, 1, 0], [], []>} : vector<16x128xbf16>, vector<16x128xbf16>, vector<16x16xf32> -> vector<16x16xf32>
    %cst_11 = arith.constant 0.0883883461 : f32
    %27 = vector.broadcast %cst_11 : f32 to vector<16x16xf32>
    %28 = arith.mulf %26, %27 : vector<16x16xf32>
    %cst_12 = arith.constant dense<0xFF800000> : vector<16xf32>
    %29 = vector.multi_reduction <maximumf>, %28, %cst_12 [1] : vector<16x16xf32> to vector<16xf32>
    %30 = vector.shape_cast %29 : vector<16xf32> to vector<16x1xf32>
    %31 = vector.broadcast %30 : vector<16x1xf32> to vector<16x16xf32>
    %32 = arith.subf %28, %31 : vector<16x16xf32>
    %33 = arith.truncf %32 : vector<16x16xf32> to vector<16x16xbf16>
    %34 = math.exp %33 : vector<16x16xbf16>
    %35 = arith.extf %34 : vector<16x16xbf16> to vector<16x16xf32>
    %cst_13 = arith.constant dense<0.000000e+00> : vector<16xf32>
    %36 = vector.multi_reduction <add>, %35, %cst_13 [1] : vector<16x16xf32> to vector<16xf32>
    %37 = vector.shape_cast %36 : vector<16xf32> to vector<16x1xf32>
    %38 = tpu.reciprocal %37 : vector<16x1xf32> -> vector<16x1xf32>
    %cst_14 = arith.constant dense<0.000000e+00> : vector<16x128xf32>
    %39 = tpu.matmul %34, %25, %cst_14 {dimension_numbers = #tpu.dot_dimension_numbers<[1], [0], [0], [1], [0, 0, 1, 1], [], []>} : vector<16x16xbf16>, vector<16x128xbf16>, vector<16x128xf32> -> vector<16x128xf32>
    %40 = vector.broadcast %38 : vector<16x1xf32> to vector<16x128xf32>
    %41 = arith.mulf %39, %40 : vector<16x128xf32>
    %42 = arith.truncf %41 : vector<16x128xf32> to vector<16x128xbf16>
    %c128 = arith.constant 128 : index
    %c0_15 = arith.constant 0 : index
    %43 = vector.load %arg2[%c128, %c0_15] : memref<256x256xbf16, #tpu.memory_space<vmem>>, vector<128x256xbf16>
    %cst_16 = arith.constant dense<0.000000e+00> : vector<16x256xf32>
    %44 = tpu.matmul %42, %43, %cst_16 {dimension_numbers = #tpu.dot_dimension_numbers<[1], [0], [0], [1], [0, 0, 1, 1], [], []>} : vector<16x128xbf16>, vector<128x256xbf16>, vector<16x256xf32> -> vector<16x256xf32>
    %45 = arith.addf %24, %44 : vector<16x256xf32>
    %46 = arith.addf %45, %1 : vector<16x256xf32>
    %c0_17 = arith.constant 0 : index
    %c0_18 = arith.constant 0 : index
    %47 = vector.load %arg3[%c0_17, %c0_18] : memref<1x256xf32, #tpu.memory_space<vmem>>, vector<1x256xf32>
    %c0_19 = arith.constant 0 : index
    %c0_20 = arith.constant 0 : index
    %48 = vector.load %arg4[%c0_19, %c0_20] : memref<1x256xf32, #tpu.memory_space<vmem>>, vector<1x256xf32>
    %cst_21 = arith.constant dense<0.000000e+00> : vector<16xf32>
    %49 = vector.multi_reduction <add>, %46, %cst_21 [1] : vector<16x256xf32> to vector<16xf32>
    %50 = vector.shape_cast %49 : vector<16xf32> to vector<16x1xf32>
    %cst_22 = arith.constant 2.560000e+02 : f32
    %51 = vector.broadcast %cst_22 : f32 to vector<16x1xf32>
    %52 = arith.divf %50, %51 : vector<16x1xf32>
    %53 = vector.broadcast %52 : vector<16x1xf32> to vector<16x256xf32>
    %54 = arith.subf %46, %53 : vector<16x256xf32>
    %55 = arith.mulf %54, %54 : vector<16x256xf32>
    %cst_23 = arith.constant dense<0.000000e+00> : vector<16xf32>
    %56 = vector.multi_reduction <add>, %55, %cst_23 [1] : vector<16x256xf32> to vector<16xf32>
    %57 = vector.shape_cast %56 : vector<16xf32> to vector<16x1xf32>
    %cst_24 = arith.constant 0.00392156886 : f32
    %58 = vector.broadcast %cst_24 : f32 to vector<16x1xf32>
    %59 = arith.mulf %57, %58 : vector<16x1xf32>
    %60 = math.sqrt %59 : vector<16x1xf32>
    %cst_25 = arith.constant 9.99999997E-7 : f32
    %61 = vector.broadcast %cst_25 : f32 to vector<16x1xf32>
    %62 = arith.addf %60, %61 : vector<16x1xf32>
    %63 = tpu.reciprocal %62 : vector<16x1xf32> -> vector<16x1xf32>
    %64 = vector.broadcast %63 : vector<16x1xf32> to vector<16x256xf32>
    %65 = arith.mulf %54, %64 : vector<16x256xf32>
    %66 = vector.broadcast %47 : vector<1x256xf32> to vector<16x256xf32>
    %67 = arith.mulf %66, %65 : vector<16x256xf32>
    %68 = vector.broadcast %48 : vector<1x256xf32> to vector<16x256xf32>
    %69 = arith.addf %67, %68 : vector<16x256xf32>
    %70 = arith.truncf %69 : vector<16x256xf32> to vector<16x256xbf16>
    %c0_26 = arith.constant 0 : index
    %c0_27 = arith.constant 0 : index
    %71 = vector.load %arg5[%c0_26, %c0_27] : memref<256x512xbf16, #tpu.memory_space<vmem>>, vector<256x512xbf16>
    %cst_28 = arith.constant dense<0.000000e+00> : vector<16x512xf32>
    %72 = tpu.matmul %70, %71, %cst_28 {dimension_numbers = #tpu.dot_dimension_numbers<[1], [0], [0], [1], [0, 0, 1, 1], [], []>} : vector<16x256xbf16>, vector<256x512xbf16>, vector<16x512xf32> -> vector<16x512xf32>
    %c0_29 = arith.constant 0 : index
    %c0_30 = arith.constant 0 : index
    %73 = vector.load %arg6[%c0_29, %c0_30] : memref<1x512xf32, #tpu.memory_space<vmem>>, vector<1x512xf32>
    %74 = vector.broadcast %73 : vector<1x512xf32> to vector<16x512xf32>
    %75 = arith.addf %72, %74 : vector<16x512xf32>
    %cst_31 = arith.constant 0.000000e+00 : f32
    %76 = vector.broadcast %cst_31 : f32 to vector<16x512xf32>
    %77 = arith.maximumf %75, %76 : vector<16x512xf32>
    %78 = arith.truncf %77 : vector<16x512xf32> to vector<16x512xbf16>
    %c0_32 = arith.constant 0 : index
    %c0_33 = arith.constant 0 : index
    %79 = vector.load %arg7[%c0_32, %c0_33] : memref<512x256xbf16, #tpu.memory_space<vmem>>, vector<512x256xbf16>
    %cst_34 = arith.constant dense<0.000000e+00> : vector<16x256xf32>
    %80 = tpu.matmul %78, %79, %cst_34 {dimension_numbers = #tpu.dot_dimension_numbers<[1], [0], [0], [1], [0, 0, 1, 1], [], []>} : vector<16x512xbf16>, vector<512x256xbf16>, vector<16x256xf32> -> vector<16x256xf32>
    %c0_35 = arith.constant 0 : index
    %c0_36 = arith.constant 0 : index
    %81 = vector.load %arg8[%c0_35, %c0_36] : memref<1x256xf32, #tpu.memory_space<vmem>>, vector<1x256xf32>
    %82 = vector.broadcast %81 : vector<1x256xf32> to vector<16x256xf32>
    %83 = arith.addf %80, %82 : vector<16x256xf32>
    %84 = arith.addf %83, %69 : vector<16x256xf32>
    %c0_37 = arith.constant 0 : index
    %c0_38 = arith.constant 0 : index
    %85 = vector.load %arg9[%c0_37, %c0_38] : memref<1x256xf32, #tpu.memory_space<vmem>>, vector<1x256xf32>
    %c0_39 = arith.constant 0 : index
    %c0_40 = arith.constant 0 : index
    %86 = vector.load %arg10[%c0_39, %c0_40] : memref<1x256xf32, #tpu.memory_space<vmem>>, vector<1x256xf32>
    %cst_41 = arith.constant dense<0.000000e+00> : vector<16xf32>
    %87 = vector.multi_reduction <add>, %84, %cst_41 [1] : vector<16x256xf32> to vector<16xf32>
    %88 = vector.shape_cast %87 : vector<16xf32> to vector<16x1xf32>
    %cst_42 = arith.constant 2.560000e+02 : f32
    %89 = vector.broadcast %cst_42 : f32 to vector<16x1xf32>
    %90 = arith.divf %88, %89 : vector<16x1xf32>
    %91 = vector.broadcast %90 : vector<16x1xf32> to vector<16x256xf32>
    %92 = arith.subf %84, %91 : vector<16x256xf32>
    %93 = arith.mulf %92, %92 : vector<16x256xf32>
    %cst_43 = arith.constant dense<0.000000e+00> : vector<16xf32>
    %94 = vector.multi_reduction <add>, %93, %cst_43 [1] : vector<16x256xf32> to vector<16xf32>
    %95 = vector.shape_cast %94 : vector<16xf32> to vector<16x1xf32>
    %cst_44 = arith.constant 0.00392156886 : f32
    %96 = vector.broadcast %cst_44 : f32 to vector<16x1xf32>
    %97 = arith.mulf %95, %96 : vector<16x1xf32>
    %98 = math.sqrt %97 : vector<16x1xf32>
    %cst_45 = arith.constant 9.99999997E-7 : f32
    %99 = vector.broadcast %cst_45 : f32 to vector<16x1xf32>
    %100 = arith.addf %98, %99 : vector<16x1xf32>
    %101 = tpu.reciprocal %100 : vector<16x1xf32> -> vector<16x1xf32>
    %102 = vector.broadcast %101 : vector<16x1xf32> to vector<16x256xf32>
    %103 = arith.mulf %92, %102 : vector<16x256xf32>
    %104 = vector.broadcast %85 : vector<1x256xf32> to vector<16x256xf32>
    %105 = arith.mulf %104, %103 : vector<16x256xf32>
    %106 = vector.broadcast %86 : vector<1x256xf32> to vector<16x256xf32>
    %107 = arith.addf %105, %106 : vector<16x256xf32>
    %108 = arith.addf %107, %69 : vector<16x256xf32>
    %c0_46 = arith.constant 0 : index
    %c0_47 = arith.constant 0 : index
    %109 = vector.load %arg11[%c0_46, %c0_47] : memref<1x256xf32, #tpu.memory_space<vmem>>, vector<1x256xf32>
    %c0_48 = arith.constant 0 : index
    %c0_49 = arith.constant 0 : index
    %110 = vector.load %arg12[%c0_48, %c0_49] : memref<1x256xf32, #tpu.memory_space<vmem>>, vector<1x256xf32>
    %cst_50 = arith.constant dense<0.000000e+00> : vector<16xf32>
    %111 = vector.multi_reduction <add>, %108, %cst_50 [1] : vector<16x256xf32> to vector<16xf32>
    %112 = vector.shape_cast %111 : vector<16xf32> to vector<16x1xf32>
    %cst_51 = arith.constant 2.560000e+02 : f32
    %113 = vector.broadcast %cst_51 : f32 to vector<16x1xf32>
    %114 = arith.divf %112, %113 : vector<16x1xf32>
    %115 = vector.broadcast %114 : vector<16x1xf32> to vector<16x256xf32>
    %116 = arith.subf %108, %115 : vector<16x256xf32>
    %117 = arith.mulf %116, %116 : vector<16x256xf32>
    %cst_52 = arith.constant dense<0.000000e+00> : vector<16xf32>
    %118 = vector.multi_reduction <add>, %117, %cst_52 [1] : vector<16x256xf32> to vector<16xf32>
    %119 = vector.shape_cast %118 : vector<16xf32> to vector<16x1xf32>
    %cst_53 = arith.constant 0.00392156886 : f32
    %120 = vector.broadcast %cst_53 : f32 to vector<16x1xf32>
    %121 = arith.mulf %119, %120 : vector<16x1xf32>
    %122 = math.sqrt %121 : vector<16x1xf32>
    %cst_54 = arith.constant 9.99999997E-7 : f32
    %123 = vector.broadcast %cst_54 : f32 to vector<16x1xf32>
    %124 = arith.addf %122, %123 : vector<16x1xf32>
    %125 = tpu.reciprocal %124 : vector<16x1xf32> -> vector<16x1xf32>
    %126 = vector.broadcast %125 : vector<16x1xf32> to vector<16x256xf32>
    %127 = arith.mulf %116, %126 : vector<16x256xf32>
    %128 = vector.broadcast %109 : vector<1x256xf32> to vector<16x256xf32>
    %129 = arith.mulf %128, %127 : vector<16x256xf32>
    %130 = vector.broadcast %110 : vector<1x256xf32> to vector<16x256xf32>
    %131 = arith.addf %129, %130 : vector<16x256xf32>
    %c0_55 = arith.constant 0 : index
    %c0_56 = arith.constant 0 : index
    %c0_57 = arith.constant 0 : index
    %132 = vector.load %arg13[%c0_55, %c0_56, %c0_57] : memref<1x16x256xf32, #tpu.memory_space<vmem>>, vector<1x16x256xf32>
    %133 = vector.shape_cast %132 : vector<1x16x256xf32> to vector<16x256xf32>
    %134 = vector.shape_cast %131 : vector<16x256xf32> to vector<1x16x256xf32>
    tpu.vector_store %arg13[%c0_55, %c0_56, %c0_57], %134 {strides = array<i32>} : memref<1x16x256xf32, #tpu.memory_space<vmem>>, vector<1x16x256xf32>,
    return
  }
  func.func @transform_0(%arg0: i32) -> (i32, i32, i32) {
    %c0_i32 = arith.constant 0 : i32
    %c0_i32_0 = arith.constant 0 : i32
    %c0_i32_1 = arith.constant 0 : i32
    return %arg0, %c0_i32, %c0_i32_0 : i32, i32, i32
  }
  func.func @transform_1(%arg0: i32) -> (i32, i32) {
    %c0_i32 = arith.constant 0 : i32
    %c0_i32_0 = arith.constant 0 : i32
    %c0_i32_1 = arith.constant 0 : i32
    return %c0_i32, %c0_i32_0 : i32, i32
  }
  func.func @transform_2(%arg0: i32) -> (i32, i32) {
    %c0_i32 = arith.constant 0 : i32
    %c0_i32_0 = arith.constant 0 : i32
    %c0_i32_1 = arith.constant 0 : i32
    return %c0_i32, %c0_i32_0 : i32, i32
  }
  func.func @transform_3(%arg0: i32) -> (i32, i32) {
    %c0_i32 = arith.constant 0 : i32
    %c0_i32_0 = arith.constant 0 : i32
    %c0_i32_1 = arith.constant 0 : i32
    return %c0_i32, %c0_i32_0 : i32, i32
  }
  func.func @transform_4(%arg0: i32) -> (i32, i32) {
    %c0_i32 = arith.constant 0 : i32
    %c0_i32_0 = arith.constant 0 : i32
    %c0_i32_1 = arith.constant 0 : i32
    return %c0_i32, %c0_i32_0 : i32, i32
  }
  func.func @transform_5(%arg0: i32) -> (i32, i32) {
    %c0_i32 = arith.constant 0 : i32
    %c0_i32_0 = arith.constant 0 : i32
    %c0_i32_1 = arith.constant 0 : i32
    return %c0_i32, %c0_i32_0 : i32, i32
  }
  func.func @transform_6(%arg0: i32) -> (i32, i32) {
    %c0_i32 = arith.constant 0 : i32
    %c0_i32_0 = arith.constant 0 : i32
    %c0_i32_1 = arith.constant 0 : i32
    return %c0_i32, %c0_i32_0 : i32, i32
  }
  func.func @transform_7(%arg0: i32) -> (i32, i32) {
    %c0_i32 = arith.constant 0 : i32
    %c0_i32_0 = arith.constant 0 : i32
    %c0_i32_1 = arith.constant 0 : i32
    return %c0_i32, %c0_i32_0 : i32, i32
  }
  func.func @transform_8(%arg0: i32) -> (i32, i32) {
    %c0_i32 = arith.constant 0 : i32
    %c0_i32_0 = arith.constant 0 : i32
    %c0_i32_1 = arith.constant 0 : i32
    return %c0_i32, %c0_i32_0 : i32, i32
  }
  func.func @transform_9(%arg0: i32) -> (i32, i32) {
    %c0_i32 = arith.constant 0 : i32
    %c0_i32_0 = arith.constant 0 : i32
    %c0_i32_1 = arith.constant 0 : i32
    return %c0_i32, %c0_i32_0 : i32, i32
  }
  func.func @transform_10(%arg0: i32) -> (i32, i32) {
    %c0_i32 = arith.constant 0 : i32
    %c0_i32_0 = arith.constant 0 : i32
    %c0_i32_1 = arith.constant 0 : i32
    return %c0_i32, %c0_i32_0 : i32, i32
  }
  func.func @transform_11(%arg0: i32) -> (i32, i32) {
    %c0_i32 = arith.constant 0 : i32
    %c0_i32_0 = arith.constant 0 : i32
    %c0_i32_1 = arith.constant 0 : i32
    return %c0_i32, %c0_i32_0 : i32, i32
  }
  func.func @transform_12(%arg0: i32) -> (i32, i32, i32) {
    %c0_i32 = arith.constant 0 : i32
    %c0_i32_0 = arith.constant 0 : i32
    %c0_i32_1 = arith.constant 0 : i32
    return %arg0, %c0_i32, %c0_i32_0 : i32, i32, i32
  }
}

</mosaic_0001>

<llo_original>
// kernel: encoder_layer_forward.1
$region0: #{encoder_layer_forward.1}
  #allocation0 [shape = 'u32[]', space=smem, size = 0x4, offset = 0x4, fixed_abs, tag = 'smem constant byte address 0x4 - core index']
  #allocation1 [shape = 'u32[144,128]{1,0:T(1,128)}', space=vmem, size = 0x12000, scoped, tag = 'internal scratch']
  %s0 = inlined_call_operand.hbm [shape: f32[2,16,256], index: 0, kind: input, shape index: {}]
  %s1 = inlined_call_operand.hbm [shape: bf16[256,256], index: 1, kind: input, shape index: {}]
  %s2 = inlined_call_operand.vmem [shape: f32[1,256], index: 2, kind: input, shape index: {}]
  %s3 = inlined_call_operand.vmem [shape: f32[1,256], index: 3, kind: input, shape index: {}]
  %s4 = inlined_call_operand.hbm [shape: bf16[256,512], index: 4, kind: input, shape index: {}]
  %s5 = inlined_call_operand.vmem [shape: f32[1,512], index: 5, kind: input, shape index: {}]
  %s6 = inlined_call_operand.hbm [shape: bf16[512,256], index: 6, kind: input, shape index: {}]
  %s7 = inlined_call_operand.vmem [shape: f32[1,256], index: 7, kind: input, shape index: {}]
  %s8 = inlined_call_operand.vmem [shape: f32[1,256], index: 8, kind: input, shape index: {}]
  %s9 = inlined_call_operand.vmem [shape: f32[1,256], index: 9, kind: input, shape index: {}]
  %s10 = inlined_call_operand.vmem [shape: f32[1,256], index: 10, kind: input, shape index: {}]
  %s11 = inlined_call_operand.vmem [shape: f32[1,256], index: 11, kind: input, shape index: {}]
  %s12 = inlined_call_operand.hbm [shape: f32[2,16,256], index: 12, kind: output, shape index: {}]
  %s13 = sld [smem:[#allocation0]]
  $region97: #{encoder_layer_forward.1} parent=0
    _
  %s15 = ssub.s32 1, %s13
  %s16 = scalar_select 0, %s15, %s13
  $region1: #{encoder_layer_forward.1} parent=0
    #allocation2 [shape = 'u8[32768]{0}', space=vmem, size = 0x8000, scoped, tag = 'input window, operand 0']
    #allocation3 [shape = 's32[2]{0}', space=sflag, size = 0x8, scoped, tag = 'scoped memory for encoder_layer_forward.1']
    #allocation4 [shape = 's32[2]{0}', space=sflag, size = 0x8, scoped, tag = 'scoped memory for encoder_layer_forward.1']
    #allocation5 [shape = 'u8[131072]{0}', space=vmem, size = 0x20000, scoped, tag = 'input window, operand 1, single buffered']
    #allocation6 [shape = 's32[1]{0}', space=sflag, size = 0x4, scoped, tag = 'scoped memory for encoder_layer_forward.1']
    #allocation7 [shape = 'u8[262144]{0}', space=vmem, size = 0x40000, scoped, tag = 'input window, operand 4, single buffered']
    #allocation8 [shape = 'u8[262144]{0}', space=vmem, size = 0x40000, scoped, tag = 'input window, operand 6, single buffered']
    #allocation9 [shape = 's32[1]{0}', space=sflag, size = 0x4, scoped, tag = 'scoped memory for encoder_layer_forward.1']
    #allocation10 [shape = 'u8[32768]{0}', space=vmem, size = 0x8000, scoped, tag = 'output window, operand 0']
    %17 = vsyncpa [#allocation3], 0
    %s18 = scalar_lea.sflag [#allocation3], 1
    %19 = vsyncpa %s18, 0
    %20 = vsyncpa [#allocation6], 0
    %21 = vsyncpa [#allocation9], 0
    %22 = vsyncpa [#allocation4], 0
    %s23 = scalar_lea.sflag [#allocation4], 1
    %24 = vsyncpa %s23, 0
    loop: start=0, step=1, limit=4
    $region2: #{encoder_layer_forward.1} parent=1 // loop_pre_header
      _
    $region3: #{encoder_layer_forward.1} parent=1 // loop_header
      %s26 = sphi 0, %s30
      %p27 = scmp.ge.s32.totalorder %s26, 4
      %s36 = sphi 0, %s38
      %s39 = sphi 0, %s36
      %s40 = sphi 0, %s39
      %s56 = sphi 0, %s40
      %s60 = sphi 0, %s60
      %s62 = sphi 0, %s60
      %s63 = sphi 0, %s62
      %s77 = sphi 0, %s63
      %s81 = sphi 0, %s81
      %s83 = sphi 0, %s81
      %s84 = sphi 0, %s83
      %s98 = sphi 0, %s84
      %s102 = sphi 0, %s102
      %s104 = sphi 0, %s102
      %s105 = sphi 0, %s104
      %s119 = sphi 0, %s105
      %s123 = sphi 0, %s123
      %s125 = sphi 0, %s123
      %s126 = sphi 0, %s125
      %s140 = sphi 0, %s126
      %s144 = sphi 0, %s144
      %s146 = sphi 0, %s144
      %s147 = sphi 0, %s146
      %s161 = sphi 0, %s147
      %s165 = sphi 0, %s165
      %s167 = sphi 0, %s165
      %s168 = sphi 0, %s167
      %s182 = sphi 0, %s168
      %s186 = sphi 0, %s186
      %s188 = sphi 0, %s186
      %s189 = sphi 0, %s188
      %s203 = sphi 0, %s189
      %s207 = sphi 0, %s207
      %s209 = sphi 0, %s207
      %s210 = sphi 0, %s209
      %s224 = sphi 0, %s210
      %s228 = sphi 0, %s228
      %s230 = sphi 0, %s228
      %s231 = sphi 0, %s230
      %s245 = sphi 0, %s231
      %s249 = sphi 0, %s249
      %s251 = sphi 0, %s249
      %s252 = sphi 0, %s251
      %s266 = sphi 0, %s252
      %s270 = sphi 0, %s270
      %s272 = sphi 0, %s270
      %s273 = sphi 0, %s272
      %s287 = sphi 0, %s273
      %s293 = sphi 0, %s295
      %s296 = sphi 0, %s293
      %s297 = sphi 0, %s296
      %s313 = sphi 0, %s297
    $region4: #{encoder_layer_forward.1} parent=1 // loop_header_branch
      %29 = sbr.rel (%p27) target = $region8
    $region5: #{encoder_layer_forward.1} parent=1 // loop_body
      %s31 = ssub.s32 %s26, 1
      %s32 = ssub.s32 %s26, 2
      %s33 = sadd.s32 %s26, 1
      %s34 = ssub.s32 %s26, %s33
      %p35 = scmp.eq.s32.totalorder %s34, 0
      %s37 = sadd.s32 %s36, 1
      %s38 = scalar_select %p35, %s36, %s37
      %p41 = pneg %p35
      %p42 = scmp.eq.s32.totalorder %s26, 1
      %p43 = por %p41, %p42
      %p44 = scmp.ne.s32.totalorder %s36, %s39
      %p45 = scmp.eq.s32.totalorder %s26, 0
      %p46 = por %p44, %p45
      %p47 = scmp.ne.s32.totalorder %s36, %s39
      %p48 = scmp.eq.s32.totalorder %s31, 1
      %p49 = por %p47, %p48
      %p50 = scmp.ne.s32.totalorder %s39, %s40
      %p51 = scmp.eq.s32.totalorder %s31, 0
      %p52 = por %p50, %p51
      %p53 = scmp.ne.s32.totalorder %s39, %s40
      %p54 = scmp.eq.s32.totalorder %s32, 1
      %p55 = por %p53, %p54
      %p57 = scmp.ne.s32.totalorder %s40, %s56
      %p58 = scmp.eq.s32.totalorder %s32, 0
      %p59 = por %p57, %p58
      %s61 = sadd.s32 %s60, 1
      %p64 = scmp.eq.s32.totalorder %s26, 1
      %p65 = scmp.ne.s32.totalorder %s60, %s62
      %p66 = scmp.eq.s32.totalorder %s26, 0
      %p67 = por %p65, %p66
      %p68 = scmp.ne.s32.totalorder %s60, %s62
      %p69 = scmp.eq.s32.totalorder %s31, 1
      %p70 = por %p68, %p69
      %p71 = scmp.ne.s32.totalorder %s62, %s63
      %p72 = scmp.eq.s32.totalorder %s31, 0
      %p73 = por %p71, %p72
      %p74 = scmp.ne.s32.totalorder %s62, %s63
      %p75 = scmp.eq.s32.totalorder %s32, 1
      %p76 = por %p74, %p75
      %p78 = scmp.ne.s32.totalorder %s63, %s77
      %p79 = scmp.eq.s32.totalorder %s32, 0
      %p80 = por %p78, %p79
      %s82 = sadd.s32 %s81, 1
      %p85 = scmp.eq.s32.totalorder %s26, 1
      %p86 = scmp.ne.s32.totalorder %s81, %s83
      %p87 = scmp.eq.s32.totalorder %s26, 0
      %p88 = por %p86, %p87
      %p89 = scmp.ne.s32.totalorder %s81, %s83
      %p90 = scmp.eq.s32.totalorder %s31, 1
      %p91 = por %p89, %p90
      %p92 = scmp.ne.s32.totalorder %s83, %s84
      %p93 = scmp.eq.s32.totalorder %s31, 0
      %p94 = por %p92, %p93
      %p95 = scmp.ne.s32.totalorder %s83, %s84
      %p96 = scmp.eq.s32.totalorder %s32, 1
      %p97 = por %p95, %p96
      %p99 = scmp.ne.s32.totalorder %s84, %s98
      %p100 = scmp.eq.s32.totalorder %s32, 0
      %p101 = por %p99, %p100
      %s103 = sadd.s32 %s102, 1
      %p106 = scmp.eq.s32.totalorder %s26, 1
      %p107 = scmp.ne.s32.totalorder %s102, %s104
      %p108 = scmp.eq.s32.totalorder %s26, 0
      %p109 = por %p107, %p108
      %p110 = scmp.ne.s32.totalorder %s102, %s104
      %p111 = scmp.eq.s32.totalorder %s31, 1
      %p112 = por %p110, %p111
      %p113 = scmp.ne.s32.totalorder %s104, %s105
      %p114 = scmp.eq.s32.totalorder %s31, 0
      %p115 = por %p113, %p114
      %p116 = scmp.ne.s32.totalorder %s104, %s105
      %p117 = scmp.eq.s32.totalorder %s32, 1
      %p118 = por %p116, %p117
      %p120 = scmp.ne.s32.totalorder %s105, %s119
      %p121 = scmp.eq.s32.totalorder %s32, 0
      %p122 = por %p120, %p121
      %s124 = sadd.s32 %s123, 1
      %p127 = scmp.eq.s32.totalorder %s26, 1
      %p128 = scmp.ne.s32.totalorder %s123, %s125
      %p129 = scmp.eq.s32.totalorder %s26, 0
      %p130 = por %p128, %p129
      %p131 = scmp.ne.s32.totalorder %s123, %s125
      %p132 = scmp.eq.s32.totalorder %s31, 1
      %p133 = por %p131, %p132
      %p134 = scmp.ne.s32.totalorder %s125, %s126
      %p135 = scmp.eq.s32.totalorder %s31, 0
      %p136 = por %p134, %p135
      %p137 = scmp.ne.s32.totalorder %s125, %s126
      %p138 = scmp.eq.s32.totalorder %s32, 1
      %p139 = por %p137, %p138
      %p141 = scmp.ne.s32.totalorder %s126, %s140
      %p142 = scmp.eq.s32.totalorder %s32, 0
      %p143 = por %p141, %p142
      %s145 = sadd.s32 %s144, 1
      %p148 = scmp.eq.s32.totalorder %s26, 1
      %p149 = scmp.ne.s32.totalorder %s144, %s146
      %p150 = scmp.eq.s32.totalorder %s26, 0
      %p151 = por %p149, %p150
      %p152 = scmp.ne.s32.totalorder %s144, %s146
      %p153 = scmp.eq.s32.totalorder %s31, 1
      %p154 = por %p152, %p153
      %p155 = scmp.ne.s32.totalorder %s146, %s147
      %p156 = scmp.eq.s32.totalorder %s31, 0
      %p157 = por %p155, %p156
      %p158 = scmp.ne.s32.totalorder %s146, %s147
      %p159 = scmp.eq.s32.totalorder %s32, 1
      %p160 = por %p158, %p159
      %p162 = scmp.ne.s32.totalorder %s147, %s161
      %p163 = scmp.eq.s32.totalorder %s32, 0
      %p164 = por %p162, %p163
      %s166 = sadd.s32 %s165, 1
      %p169 = scmp.eq.s32.totalorder %s26, 1
      %p170 = scmp.ne.s32.totalorder %s165, %s167
      %p171 = scmp.eq.s32.totalorder %s26, 0
      %p172 = por %p170, %p171
      %p173 = scmp.ne.s32.totalorder %s165, %s167
      %p174 = scmp.eq.s32.totalorder %s31, 1
      %p175 = por %p173, %p174
      %p176 = scmp.ne.s32.totalorder %s167, %s168
      %p177 = scmp.eq.s32.totalorder %s31, 0
      %p178 = por %p176, %p177
      %p179 = scmp.ne.s32.totalorder %s167, %s168
      %p180 = scmp.eq.s32.totalorder %s32, 1
      %p181 = por %p179, %p180
      %p183 = scmp.ne.s32.totalorder %s168, %s182
      %p184 = scmp.eq.s32.totalorder %s32, 0
      %p185 = por %p183, %p184
      %s187 = sadd.s32 %s186, 1
      %p190 = scmp.eq.s32.totalorder %s26, 1
      %p191 = scmp.ne.s32.totalorder %s186, %s188
      %p192 = scmp.eq.s32.totalorder %s26, 0
      %p193 = por %p191, %p192
      %p194 = scmp.ne.s32.totalorder %s186, %s188
      %p195 = scmp.eq.s32.totalorder %s31, 1
      %p196 = por %p194, %p195
      %p197 = scmp.ne.s32.totalorder %s188, %s189
      %p198 = scmp.eq.s32.totalorder %s31, 0
      %p199 = por %p197, %p198
      %p200 = scmp.ne.s32.totalorder %s188, %s189
      %p201 = scmp.eq.s32.totalorder %s32, 1
      %p202 = por %p200, %p201
      %p204 = scmp.ne.s32.totalorder %s189, %s203
      %p205 = scmp.eq.s32.totalorder %s32, 0
      %p206 = por %p204, %p205
      %s208 = sadd.s32 %s207, 1
      %p211 = scmp.eq.s32.totalorder %s26, 1
      %p212 = scmp.ne.s32.totalorder %s207, %s209
      %p213 = scmp.eq.s32.totalorder %s26, 0
      %p214 = por %p212, %p213
      %p215 = scmp.ne.s32.totalorder %s207, %s209
      %p216 = scmp.eq.s32.totalorder %s31, 1
      %p217 = por %p215, %p216
      %p218 = scmp.ne.s32.totalorder %s209, %s210
      %p219 = scmp.eq.s32.totalorder %s31, 0
      %p220 = por %p218, %p219
      %p221 = scmp.ne.s32.totalorder %s209, %s210
      %p222 = scmp.eq.s32.totalorder %s32, 1
      %p223 = por %p221, %p222
      %p225 = scmp.ne.s32.totalorder %s210, %s224
      %p226 = scmp.eq.s32.totalorder %s32, 0
      %p227 = por %p225, %p226
      %s229 = sadd.s32 %s228, 1
      %p232 = scmp.eq.s32.totalorder %s26, 1
      %p233 = scmp.ne.s32.totalorder %s228, %s230
      %p234 = scmp.eq.s32.totalorder %s26, 0
      %p235 = por %p233, %p234
      %p236 = scmp.ne.s32.totalorder %s228, %s230
      %p237 = scmp.eq.s32.totalorder %s31, 1
      %p238 = por %p236, %p237
      %p239 = scmp.ne.s32.totalorder %s230, %s231
      %p240 = scmp.eq.s32.totalorder %s31, 0
      %p241 = por %p239, %p240
      %p242 = scmp.ne.s32.totalorder %s230, %s231
      %p243 = scmp.eq.s32.totalorder %s32, 1
      %p244 = por %p242, %p243
      %p246 = scmp.ne.s32.totalorder %s231, %s245
      %p247 = scmp.eq.s32.totalorder %s32, 0
      %p248 = por %p246, %p247
      %s250 = sadd.s32 %s249, 1
      %p253 = scmp.eq.s32.totalorder %s26, 1
      %p254 = scmp.ne.s32.totalorder %s249, %s251
      %p255 = scmp.eq.s32.totalorder %s26, 0
      %p256 = por %p254, %p255
      %p257 = scmp.ne.s32.totalorder %s249, %s251
      %p258 = scmp.eq.s32.totalorder %s31, 1
      %p259 = por %p257, %p258
      %p260 = scmp.ne.s32.totalorder %s251, %s252
      %p261 = scmp.eq.s32.totalorder %s31, 0
      %p262 = por %p260, %p261
      %p263 = scmp.ne.s32.totalorder %s251, %s252
      %p264 = scmp.eq.s32.totalorder %s32, 1
      %p265 = por %p263, %p264
      %p267 = scmp.ne.s32.totalorder %s252, %s266
      %p268 = scmp.eq.s32.totalorder %s32, 0
      %p269 = por %p267, %p268
      %s271 = sadd.s32 %s270, 1
      %p274 = scmp.eq.s32.totalorder %s26, 1
      %p275 = scmp.ne.s32.totalorder %s270, %s272
      %p276 = scmp.eq.s32.totalorder %s26, 0
      %p277 = por %p275, %p276
      %p278 = scmp.ne.s32.totalorder %s270, %s272
      %p279 = scmp.eq.s32.totalorder %s31, 1
      %p280 = por %p278, %p279
      %p281 = scmp.ne.s32.totalorder %s272, %s273
      %p282 = scmp.eq.s32.totalorder %s31, 0
      %p283 = por %p281, %p282
      %p284 = scmp.ne.s32.totalorder %s272, %s273
      %p285 = scmp.eq.s32.totalorder %s32, 1
      %p286 = por %p284, %p285
      %p288 = scmp.ne.s32.totalorder %s273, %s287
      %p289 = scmp.eq.s32.totalorder %s32, 0
      %p290 = por %p288, %p289
      %s291 = ssub.s32 %s26, %s33
      %p292 = scmp.eq.s32.totalorder %s291, 0
      %s294 = sadd.s32 %s293, 1
      %s295 = scalar_select %p292, %s293, %s294
      %p298 = pneg %p292
      %p299 = scmp.eq.s32.totalorder %s26, 1
      %p300 = por %p298, %p299
      %p301 = scmp.ne.s32.totalorder %s293, %s296
      %p302 = scmp.eq.s32.totalorder %s26, 0
      %p303 = por %p301, %p302
      %p304 = scmp.ne.s32.totalorder %s293, %s296
      %p305 = scmp.eq.s32.totalorder %s31, 1
      %p306 = por %p304, %p305
      %p307 = scmp.ne.s32.totalorder %s296, %s297
      %p308 = scmp.eq.s32.totalorder %s31, 0
      %p309 = por %p307, %p308
      %p310 = scmp.ne.s32.totalorder %s296, %s297
      %p311 = scmp.eq.s32.totalorder %s32, 1
      %p312 = por %p310, %p311
      %p314 = scmp.ne.s32.totalorder %s297, %s313
      %p315 = scmp.eq.s32.totalorder %s32, 0
      %p316 = por %p314, %p315
      %p317 = scmp.le.s32.totalorder 1, %s26
      %p318 = scmp.lt.s32.totalorder %s26, 3
      %p319 = pnand %p317, %p318
      %p320 = pneg %p319
      // Predicated region
      $region9: #{encoder_layer_forward.1} parent=5 // pred_check
        _
      $region10: #{encoder_layer_forward.1} parent=5 // pred_check_branch
        %322 = sbr.rel (%p319) target = $region12
      $region11: #{encoder_layer_forward.1} parent=5 // pred_region
        %s323 = ssub.s32 %s26, 1
        // Predicated region
        $region13: #{encoder_layer_forward.1} parent=11 // pred_check
          %p324 = pneg %p73
        $region14: #{encoder_layer_forward.1} parent=11 // pred_check_branch
          %326 = sbr.rel (%p324) target = $region16
        $region15: #{encoder_layer_forward.1} parent=11 // pred_region
          %s328 = ssub.s32 4096, 4096
          %329 = vsyncadd [#allocation6], %s328
          %s330 = sshll.u32 [#allocation5], 4
          %s331 = int_to_ptr.vmem [resolvable:$true] %s330
          %336 = dma.hbm_to_vmem [thread:$0]  %s1, 4096, %s331, [#allocation6], 128, 128, 8
        $region16: #{encoder_layer_forward.1} parent=11 // pred_fallthru
          _
        // Predicated region
        $region17: #{encoder_layer_forward.1} parent=11 // pred_check
          %p337 = pneg %p94
        $region18: #{encoder_layer_forward.1} parent=11 // pred_check_branch
          %339 = sbr.rel (%p337) target = $region20
        $region19: #{encoder_layer_forward.1} parent=11 // pred_region
          _
        $region20: #{encoder_layer_forward.1} parent=11 // pred_fallthru
          _
        // Predicated region
        $region21: #{encoder_layer_forward.1} parent=11 // pred_check
          %p340 = pneg %p115
        $region22: #{encoder_layer_forward.1} parent=11 // pred_check_branch
          %342 = sbr.rel (%p340) target = $region24
        $region23: #{encoder_layer_forward.1} parent=11 // pred_region
          _
        $region24: #{encoder_layer_forward.1} parent=11 // pred_fallthru
          _
        // Predicated region
        $region25: #{encoder_layer_forward.1} parent=11 // pred_check
          %p343 = pneg %p136
        $region26: #{encoder_layer_forward.1} parent=11 // pred_check_branch
          %345 = sbr.rel (%p343) target = $region28
        $region27: #{encoder_layer_forward.1} parent=11 // pred_region
          %s347 = ssub.s32 8192, 8192
          %348 = vsyncadd [#allocation6], %s347
          %s349 = sshll.u32 [#allocation7], 4
          %s350 = int_to_ptr.vmem [resolvable:$true] %s349
          %355 = dma.hbm_to_vmem [thread:$0]  %s4, 8192, %s350, [#allocation6], 256, 256, 16
        $region28: #{encoder_layer_forward.1} parent=11 // pred_fallthru
          _
        // Predicated region
        $region29: #{encoder_layer_forward.1} parent=11 // pred_check
          %p356 = pneg %p157
        $region30: #{encoder_layer_forward.1} parent=11 // pred_check_branch
          %358 = sbr.rel (%p356) target = $region32
        $region31: #{encoder_layer_forward.1} parent=11 // pred_region
          _
        $region32: #{encoder_layer_forward.1} parent=11 // pred_fallthru
          _
        // Predicated region
        $region33: #{encoder_layer_forward.1} parent=11 // pred_check
          %p359 = pneg %p178
        $region34: #{encoder_layer_forward.1} parent=11 // pred_check_branch
          %361 = sbr.rel (%p359) target = $region36
        $region35: #{encoder_layer_forward.1} parent=11 // pred_region
          %s363 = ssub.s32 8192, 8192
          %364 = vsyncadd [#allocation9], %s363
          %s365 = sshll.u32 [#allocation8], 4
          %s366 = int_to_ptr.vmem [resolvable:$true] %s365
          %371 = dma.hbm_to_vmem [thread:$0]  %s6, 8192, %s366, [#allocation9], 128, 128, 8
        $region36: #{encoder_layer_forward.1} parent=11 // pred_fallthru
          _
        // Predicated region
        $region37: #{encoder_layer_forward.1} parent=11 // pred_check
          %p372 = pneg %p199
        $region38: #{encoder_layer_forward.1} parent=11 // pred_check_branch
          %374 = sbr.rel (%p372) target = $region40
        $region39: #{encoder_layer_forward.1} parent=11 // pred_region
          _
        $region40: #{encoder_layer_forward.1} parent=11 // pred_fallthru
          _
        // Predicated region
        $region41: #{encoder_layer_forward.1} parent=11 // pred_check
          %p375 = pneg %p220
        $region42: #{encoder_layer_forward.1} parent=11 // pred_check_branch
          %377 = sbr.rel (%p375) target = $region44
        $region43: #{encoder_layer_forward.1} parent=11 // pred_region
          _
        $region44: #{encoder_layer_forward.1} parent=11 // pred_fallthru
          _
        // Predicated region
        $region45: #{encoder_layer_forward.1} parent=11 // pred_check
          %p378 = pneg %p241
        $region46: #{encoder_layer_forward.1} parent=11 // pred_check_branch
          %380 = sbr.rel (%p378) target = $region48
        $region47: #{encoder_layer_forward.1} parent=11 // pred_region
          _
        $region48: #{encoder_layer_forward.1} parent=11 // pred_fallthru
          _
        // Predicated region
        $region49: #{encoder_layer_forward.1} parent=11 // pred_check
          %p381 = pneg %p262
        $region50: #{encoder_layer_forward.1} parent=11 // pred_check_branch
          %383 = sbr.rel (%p381) target = $region52
        $region51: #{encoder_layer_forward.1} parent=11 // pred_region
          _
        $region52: #{encoder_layer_forward.1} parent=11 // pred_fallthru
          _
        // Predicated region
        $region53: #{encoder_layer_forward.1} parent=11 // pred_check
          %p384 = pneg %p283
        $region54: #{encoder_layer_forward.1} parent=11 // pred_check_branch
          %386 = sbr.rel (%p384) target = $region56
        $region55: #{encoder_layer_forward.1} parent=11 // pred_region
          _
        $region56: #{encoder_layer_forward.1} parent=11 // pred_fallthru
          _
      $region12: #{encoder_layer_forward.1} parent=5 // pred_fallthru
        _
      %p387 = scmp.lt.s32.totalorder %s26, 2
      // Predicated region
      $region57: #{encoder_layer_forward.1} parent=5 // pred_check
        %p388 = pneg %p387
      $region58: #{encoder_layer_forward.1} parent=5 // pred_check_branch
        %390 = sbr.rel (%p388) target = $region60
      $region59: #{encoder_layer_forward.1} parent=5 // pred_region
        // Predicated region
        $region61: #{encoder_layer_forward.1} parent=59 // pred_check
          %p391 = pneg %p46
        $region62: #{encoder_layer_forward.1} parent=59 // pred_check_branch
          %393 = sbr.rel (%p391) target = $region64
        $region63: #{encoder_layer_forward.1} parent=59 // pred_region
          %s394 = sand.u32 %s36, 1
          %s395 = scalar_lea.sflag [#allocation3], %s394
          %s396 = sand.u32 %s36, 1
          %s397 = smul.addr %s396, 32
          %s398 = scalar_lea.vmem [#allocation2], %s397
          %s400 = ssub.s32 512, 512
          %401 = vsyncadd %s395, %s400
          %s402 = smul.addr %s26, 4
          %s403 = smul.addr %s402, 128
          %s404 = scalar_lea.hbm %s0, %s403
          %s405 = sshll.u32 %s398, 4
          %s406 = int_to_ptr.vmem [resolvable:$true] %s405
          %411 = dma.hbm_to_vmem [thread:$0]  %s404, 512, %s406, %s395, 256, 256, 16
        $region64: #{encoder_layer_forward.1} parent=59 // pred_fallthru
          _
      $region60: #{encoder_layer_forward.1} parent=5 // pred_fallthru
        _
      %p412 = scmp.le.s32.totalorder 1, %s26
      %p413 = scmp.lt.s32.totalorder %s26, 3
      %p414 = pnand %p412, %p413
      %p415 = pneg %p414
      // Predicated region
      $region65: #{encoder_layer_forward.1} parent=5 // pred_check
        _
      $region66: #{encoder_layer_forward.1} parent=5 // pred_check_branch
        %417 = sbr.rel (%p414) target = $region68
      $region67: #{encoder_layer_forward.1} parent=5 // pred_region
        %s418 = ssub.s32 %s26, 1
        %s419 = sand.u32 %s39, 1
        %s420 = scalar_lea.sflag [#allocation3], %s419
        %s421 = sand.u32 %s39, 1
        %s422 = smul.addr %s421, 32
        %s423 = scalar_lea.vmem [#allocation2], %s422
        // Predicated region
        $region69: #{encoder_layer_forward.1} parent=67 // pred_check
          %p424 = pneg %p52
        $region70: #{encoder_layer_forward.1} parent=67 // pred_check_branch
          %426 = sbr.rel (%p424) target = $region72
        $region71: #{encoder_layer_forward.1} parent=67 // pred_region
          %427 = dma.done %s420, 512
        $region72: #{encoder_layer_forward.1} parent=67 // pred_fallthru
          _
        // Predicated region
        $region73: #{encoder_layer_forward.1} parent=67 // pred_check
          %p428 = pneg %p73
        $region74: #{encoder_layer_forward.1} parent=67 // pred_check_branch
          %430 = sbr.rel (%p428) target = $region76
        $region75: #{encoder_layer_forward.1} parent=67 // pred_region
          %431 = dma.done [#allocation6], 4096
        $region76: #{encoder_layer_forward.1} parent=67 // pred_fallthru
          _
        // Predicated region
        $region77: #{encoder_layer_forward.1} parent=67 // pred_check
          %p432 = pneg %p136
        $region78: #{encoder_layer_forward.1} parent=67 // pred_check_branch
          %434 = sbr.rel (%p432) target = $region80
        $region79: #{encoder_layer_forward.1} parent=67 // pred_region
          %435 = dma.done [#allocation6], 8192
        $region80: #{encoder_layer_forward.1} parent=67 // pred_fallthru
          _
        // Predicated region
        $region81: #{encoder_layer_forward.1} parent=67 // pred_check
          %p436 = pneg %p178
        $region82: #{encoder_layer_forward.1} parent=67 // pred_check_branch
          %438 = sbr.rel (%p436) target = $region84
        $region83: #{encoder_layer_forward.1} parent=67 // pred_region
          %439 = dma.done [#allocation9], 8192
        $region84: #{encoder_layer_forward.1} parent=67 // pred_fallthru
          _
        %s440 = sand.u32 %s39, 1
        %s441 = scalar_lea.sflag [#allocation3], %s440
        %s442 = sand.u32 %s39, 1
        %s443 = smul.addr %s442, 32
        %s444 = scalar_lea.vmem [#allocation2], %s443
        %p445 = pneg %p52
        %p446 = pneg %p49
        %p447 = pneg %p73
        %p448 = pneg %p70
        %p449 = pneg %p94
        %p450 = pneg %p91
        %p451 = pneg %p115
        %p452 = pneg %p112
        %p453 = pneg %p136
        %p454 = pneg %p133
        %p455 = pneg %p157
        %p456 = pneg %p154
        %p457 = pneg %p178
        %p458 = pneg %p175
        %p459 = pneg %p199
        %p460 = pneg %p196
        %p461 = pneg %p220
        %p462 = pneg %p217
        %p463 = pneg %p241
        %p464 = pneg %p238
        %p465 = pneg %p262
        %p466 = pneg %p259
        %p467 = pneg %p283
        %p468 = pneg %p280
        %p469 = pneg %p309
        %p470 = pneg %p306
        %s471 = sand.u32 %s296, 1
        %s472 = scalar_lea.sflag [#allocation4], %s471
        %s473 = sand.u32 %s296, 1
        %s474 = smul.addr %s473, 32
        %s475 = scalar_lea.vmem [#allocation10], %s474
        %v477 = vld [vmem:[%s423] sm:$0xff]
        %v478 = vld [vmem:[%s423 + $0x8] sm:$0xff]
        %v479 = vld [vmem:[%s423 + $0x10] sm:$0xff]
        %v480 = vld [vmem:[%s423 + $0x18] sm:$0xff]
        %v481 = vpack.c.bf16 %v479, %v477
        %v482 = vpack.c.bf16 %v480, %v478
        %483 = vmatprep.subr.bf16.mxu0 0
        %484 = vmatpush1.bf16.xpose.msra.mxu0 %v481
        %485 = vmatprep.subr.bf16.mxu0 0
        %486 = vmatpush1.bf16.xpose.msra.mxu0 0
        %487 = vmatprep.subr.bf16.mxu0 0
        %488 = vmatpush1.bf16.xpose.msra.mxu0 0
        %489 = vmatprep.subr.bf16.mxu0 0
        %490 = vmatpush1.bf16.xpose.msra.mxu0 0
        %491 = vmatprep.subr.bf16.mxu0 0
        %492 = vmatpush1.bf16.xpose.msra.mxu0 0
        %493 = vmatprep.subr.bf16.mxu0 0
        %494 = vmatpush1.bf16.xpose.msra.mxu0 0
        %495 = vmatprep.subr.bf16.mxu0 0
        %496 = vmatpush1.bf16.xpose.msra.mxu0 0
        %497 = vmatprep.subr.bf16.mxu0 0
        %498 = vmatpush1.bf16.xpose.msra.mxu0 0
        %499 = vmatprep.subr.bf16.mxu0 0
        %500 = vmatpush1.bf16.xpose.msra.mxu0 0
        %501 = vmatprep.subr.bf16.mxu0 0
        %502 = vmatpush1.bf16.xpose.msra.mxu0 0
        %503 = vmatprep.subr.bf16.mxu0 0
        %504 = vmatpush1.bf16.xpose.msra.mxu0 0
        %505 = vmatprep.subr.bf16.mxu0 0
        %506 = vmatpush1.bf16.xpose.msra.mxu0 0
        %507 = vmatprep.subr.bf16.mxu0 0
        %508 = vmatpush1.bf16.xpose.msra.mxu0 0
        %509 = vmatprep.subr.bf16.mxu0 0
        %510 = vmatpush1.bf16.xpose.msra.mxu0 0
        %511 = vmatprep.subr.bf16.mxu0 0
        %512 = vmatpush1.bf16.xpose.msra.mxu0 0
        %513 = vmatprep.subr.bf16.mxu0 0
        %514 = vmatpush1.bf16.xpose.msra.mxu0 0
        %515 = vmatprep.mubr.bf16.mxu0 0
        %516 = vmatmul.mubr.bf16.gmra.mrb[0].mxu0 %v481
        %v517 = vpop.f32.mrb[0].mxu0
        %v518 = vadd.f32 0.0, %v517
        %v519 = vpop.f32.mrb[0].mxu0
        %v520 = vpop.f32.mrb[0].mxu0
        %v521 = vadd.f32 0.0, %v520
        %v522 = vpop.f32.mrb[0].mxu0
        %523 = vdwg.mxu0
        %v524 = vmul.f32 %v518, 0.088388346
        %v525 = vmul.f32 %v521, 0.088388346
        %vm526 = vcmask 130048
        %v527 = vsel %vm526, %v524, -inf
        %528 = vmax.xlane.f32.xlu0 %v527
        %v529 = vpop.xlane.xlu0 %528
        %v530 = vsel %vm526, %v525, -inf
        %531 = vmax.xlane.f32.xlu0 %v530
        %v532 = vpop.xlane.xlu0 %531
        %v533 = vsub.f32 %v524, %v529
        %v534 = vsub.f32 %v525, %v532
        %v535 = vpack.c.bf16 %v534, %v533
        %v537 = vmul.bf16 %v535, 1069105081
        %v538 = vpow.bf16.pop %v537
        %v539 = vunpack.c.l.bf16 %v538
        %v540 = vunpack.c.h.bf16 %v538
        %v541 = vsel %vm526, %v539, 0.0
        %542 = vadd.xlane.f32.xlu0 %v541
        %v543 = vpop.xlane.xlu0 %542
        %v544 = vsel %vm526, %v540, 0.0
        %545 = vadd.xlane.f32.xlu0 %v544
        %v546 = vpop.xlane.xlu0 %545
        %v547 = vrcp.pop %v543
        %v548 = vrcp.pop %v546
        %v550 = vsel %vm526, %v538, 0
        %552 = vmatprep.subr.bf16.mxu0 0
        %553 = vmatpush1.bf16.msra.mxu0 %v481
        %554 = vmatprep.subr.bf16.mxu0 0
        %555 = vmatpush1.bf16.msra.mxu0 0
        %556 = vmatprep.subr.bf16.mxu0 0
        %557 = vmatpush1.bf16.msra.mxu0 0
        %558 = vmatprep.subr.bf16.mxu0 0
        %559 = vmatpush1.bf16.msra.mxu0 0
        %560 = vmatprep.subr.bf16.mxu0 0
        %561 = vmatpush1.bf16.msra.mxu0 0
        %562 = vmatprep.subr.bf16.mxu0 0
        %563 = vmatpush1.bf16.msra.mxu0 0
        %564 = vmatprep.subr.bf16.mxu0 0
        %565 = vmatpush1.bf16.msra.mxu0 0
        %566 = vmatprep.subr.bf16.mxu0 0
        %567 = vmatpush1.bf16.msra.mxu0 0
        %568 = vmatprep.subr.bf16.mxu0 0
        %569 = vmatpush1.bf16.msra.mxu0 0
        %570 = vmatprep.subr.bf16.mxu0 0
        %571 = vmatpush1.bf16.msra.mxu0 0
        %572 = vmatprep.subr.bf16.mxu0 0
        %573 = vmatpush1.bf16.msra.mxu0 0
        %574 = vmatprep.subr.bf16.mxu0 0
        %575 = vmatpush1.bf16.msra.mxu0 0
        %576 = vmatprep.subr.bf16.mxu0 0
        %577 = vmatpush1.bf16.msra.mxu0 0
        %578 = vmatprep.subr.bf16.mxu0 0
        %579 = vmatpush1.bf16.msra.mxu0 0
        %580 = vmatprep.subr.bf16.mxu0 0
        %581 = vmatpush1.bf16.msra.mxu0 0
        %582 = vmatprep.subr.bf16.mxu0 0
        %583 = vmatpush1.bf16.msra.mxu0 0
        %584 = vmatprep.mubr.bf16.mxu0 0
        %585 = vmatmul.mubr.bf16.gmra.mrb[0].mxu0 %v550
        %v586 = vpop.f32.mrb[0].mxu0
        %v587 = vadd.f32 0.0, %v586
        %v588 = vpop.f32.mrb[0].mxu0
        %v589 = vpop.f32.mrb[0].mxu0
        %v590 = vadd.f32 0.0, %v589
        %v591 = vpop.f32.mrb[0].mxu0
        %592 = vdwg.mxu0
        %v593 = vmul.f32 %v587, %v547
        %v594 = vmul.f32 %v590, %v548
        %v595 = vpack.c.bf16 %v594, %v593
        %v596 = vld [vmem:[#allocation5] sm:$0xff]
        %v597 = vld [vmem:[#allocation5 + $0x8] sm:$0xff]
        %v598 = vld [vmem:[#allocation5 + $0x10] sm:$0xff]
        %v599 = vld [vmem:[#allocation5 + $0x18] sm:$0xff]
        %v600 = vld [vmem:[#allocation5 + $0x20] sm:$0xff]
        %v601 = vld [vmem:[#allocation5 + $0x28] sm:$0xff]
        %v602 = vld [vmem:[#allocation5 + $0x30] sm:$0xff]
        %v603 = vld [vmem:[#allocation5 + $0x38] sm:$0xff]
        %v604 = vld [vmem:[#allocation5 + $0x40] sm:$0xff]
        %v605 = vld [vmem:[#allocation5 + $0x48] sm:$0xff]
        %v606 = vld [vmem:[#allocation5 + $0x50] sm:$0xff]
        %v607 = vld [vmem:[#allocation5 + $0x58] sm:$0xff]
        %v608 = vld [vmem:[#allocation5 + $0x60] sm:$0xff]
        %v609 = vld [vmem:[#allocation5 + $0x68] sm:$0xff]
        %v610 = vld [vmem:[#allocation5 + $0x70] sm:$0xff]
        %v611 = vld [vmem:[#allocation5 + $0x78] sm:$0xff]
        %612 = vmatprep.subr.bf16.mxu0 0
        %613 = vmatpush1.bf16.xpose.msra.mxu0 %v482
        %614 = vmatprep.subr.bf16.mxu0 0
        %615 = vmatpush1.bf16.xpose.msra.mxu0 0
        %616 = vmatprep.subr.bf16.mxu0 0
        %617 = vmatpush1.bf16.xpose.msra.mxu0 0
        %618 = vmatprep.subr.bf16.mxu0 0
        %619 = vmatpush1.bf16.xpose.msra.mxu0 0
        %620 = vmatprep.subr.bf16.mxu0 0
        %621 = vmatpush1.bf16.xpose.msra.mxu0 0
        %622 = vmatprep.subr.bf16.mxu0 0
        %623 = vmatpush1.bf16.xpose.msra.mxu0 0
        %624 = vmatprep.subr.bf16.mxu0 0
        %625 = vmatpush1.bf16.xpose.msra.mxu0 0
        %626 = vmatprep.subr.bf16.mxu0 0
        %627 = vmatpush1.bf16.xpose.msra.mxu0 0
        %628 = vmatprep.subr.bf16.mxu0 0
        %629 = vmatpush1.bf16.xpose.msra.mxu0 0
        %630 = vmatprep.subr.bf16.mxu0 0
        %631 = vmatpush1.bf16.xpose.msra.mxu0 0
        %632 = vmatprep.subr.bf16.mxu0 0
        %633 = vmatpush1.bf16.xpose.msra.mxu0 0
        %634 = vmatprep.subr.bf16.mxu0 0
        %635 = vmatpush1.bf16.xpose.msra.mxu0 0
        %636 = vmatprep.subr.bf16.mxu0 0
        %637 = vmatpush1.bf16.xpose.msra.mxu0 0
        %638 = vmatprep.subr.bf16.mxu0 0
        %639 = vmatpush1.bf16.xpose.msra.mxu0 0
        %640 = vmatprep.subr.bf16.mxu0 0
        %641 = vmatpush1.bf16.xpose.msra.mxu0 0
        %642 = vmatprep.subr.bf16.mxu0 0
        %643 = vmatpush1.bf16.xpose.msra.mxu0 0
        %644 = vmatprep.mubr.bf16.mxu0 0
        %645 = vmatmul.mubr.bf16.gmra.mrb[0].mxu0 %v482
        %v646 = vpop.f32.mrb[0].mxu0
        %v647 = vadd.f32 0.0, %v646
        %v648 = vpop.f32.mrb[0].mxu0
        %v649 = vpop.f32.mrb[0].mxu0
        %v650 = vadd.f32 0.0, %v649
        %v651 = vpop.f32.mrb[0].mxu0
        %652 = vdwg.mxu0
        %v653 = vmul.f32 %v647, 0.088388346
        %v654 = vmul.f32 %v650, 0.088388346
        %v655 = vsel %vm526, %v653, -inf
        %656 = vmax.xlane.f32.xlu0 %v655
        %v657 = vpop.xlane.xlu0 %656
        %v658 = vsel %vm526, %v654, -inf
        %659 = vmax.xlane.f32.xlu0 %v658
        %v660 = vpop.xlane.xlu0 %659
        %v661 = vsub.f32 %v653, %v657
        %v662 = vsub.f32 %v654, %v660
        %v663 = vpack.c.bf16 %v662, %v661
        %v665 = vmul.bf16 %v663, 1069105081
        %v666 = vpow.bf16.pop %v665
        %v667 = vunpack.c.l.bf16 %v666
        %v668 = vunpack.c.h.bf16 %v666
        %v669 = vsel %vm526, %v667, 0.0
        %670 = vadd.xlane.f32.xlu0 %v669
        %v671 = vpop.xlane.xlu0 %670
        %v672 = vsel %vm526, %v668, 0.0
        %673 = vadd.xlane.f32.xlu0 %v672
        %v674 = vpop.xlane.xlu0 %673
        %v675 = vrcp.pop %v671
        %v676 = vrcp.pop %v674
        %v678 = vsel %vm526, %v666, 0
        %680 = vmatprep.subr.bf16.mxu0 0
        %681 = vmatpush1.bf16.msra.mxu0 %v482
        %682 = vmatprep.subr.bf16.mxu0 0
        %683 = vmatpush1.bf16.msra.mxu0 0
        %684 = vmatprep.subr.bf16.mxu0 0
        %685 = vmatpush1.bf16.msra.mxu0 0
        %686 = vmatprep.subr.bf16.mxu0 0
        %687 = vmatpush1.bf16.msra.mxu0 0
        %688 = vmatprep.subr.bf16.mxu0 0
        %689 = vmatpush1.bf16.msra.mxu0 0
        %690 = vmatprep.subr.bf16.mxu0 0
        %691 = vmatpush1.bf16.msra.mxu0 0
        %692 = vmatprep.subr.bf16.mxu0 0
        %693 = vmatpush1.bf16.msra.mxu0 0
        %694 = vmatprep.subr.bf16.mxu0 0
        %695 = vmatpush1.bf16.msra.mxu0 0
        %696 = vmatprep.subr.bf16.mxu0 0
        %697 = vmatpush1.bf16.msra.mxu0 0
        %698 = vmatprep.subr.bf16.mxu0 0
        %699 = vmatpush1.bf16.msra.mxu0 0
        %700 = vmatprep.subr.bf16.mxu0 0
        %701 = vmatpush1.bf16.msra.mxu0 0
        %702 = vmatprep.subr.bf16.mxu0 0
        %703 = vmatpush1.bf16.msra.mxu0 0
        %704 = vmatprep.subr.bf16.mxu0 0
        %705 = vmatpush1.bf16.msra.mxu0 0
        %706 = vmatprep.subr.bf16.mxu0 0
        %707 = vmatpush1.bf16.msra.mxu0 0
        %708 = vmatprep.subr.bf16.mxu0 0
        %709 = vmatpush1.bf16.msra.mxu0 0
        %710 = vmatprep.subr.bf16.mxu0 0
        %711 = vmatpush1.bf16.msra.mxu0 0
        %712 = vmatprep.mubr.bf16.mxu0 0
        %713 = vmatmul.mubr.bf16.gmra.mrb[0].mxu0 %v678
        %v714 = vpop.f32.mrb[0].mxu0
        %v715 = vadd.f32 0.0, %v714
        %v716 = vpop.f32.mrb[0].mxu0
        %v717 = vpop.f32.mrb[0].mxu0
        %v718 = vadd.f32 0.0, %v717
        %v719 = vpop.f32.mrb[0].mxu0
        %720 = vdwg.mxu0
        %v721 = vmul.f32 %v715, %v675
        %v722 = vmul.f32 %v718, %v676
        %v723 = vpack.c.bf16 %v722, %v721
        %v724 = vld [vmem:[#allocation5 + $0x80] sm:$0xff]
        %v725 = vld [vmem:[#allocation5 + $0x88] sm:$0xff]
        %v726 = vld [vmem:[#allocation5 + $0x90] sm:$0xff]
        %v727 = vld [vmem:[#allocation5 + $0x98] sm:$0xff]
        %v728 = vld [vmem:[#allocation5 + $0xa0] sm:$0xff]
        %v729 = vld [vmem:[#allocation5 + $0xa8] sm:$0xff]
        %v730 = vld [vmem:[#allocation5 + $0xb0] sm:$0xff]
        %v731 = vld [vmem:[#allocation5 + $0xb8] sm:$0xff]
        %v732 = vld [vmem:[#allocation5 + $0xc0] sm:$0xff]
        %v733 = vld [vmem:[#allocation5 + $0xc8] sm:$0xff]
        %v734 = vld [vmem:[#allocation5 + $0xd0] sm:$0xff]
        %v735 = vld [vmem:[#allocation5 + $0xd8] sm:$0xff]
        %v736 = vld [vmem:[#allocation5 + $0xe0] sm:$0xff]
        %v737 = vld [vmem:[#allocation5 + $0xe8] sm:$0xff]
        %v738 = vld [vmem:[#allocation5 + $0xf0] sm:$0xff]
        %v739 = vld [vmem:[#allocation5 + $0xf8] sm:$0xff]
        %v756 = vunpack.c.l.b16 %v724
        %v757 = vunpack.c.h.b16 %v724
        %v758 = vunpack.c.l.b16 %v725
        %v759 = vunpack.c.h.b16 %v725
        %v760 = vunpack.c.l.b16 %v726
        %v761 = vunpack.c.h.b16 %v726
        %v762 = vunpack.c.l.b16 %v727
        %v763 = vunpack.c.h.b16 %v727
        %v764 = vunpack.c.l.b16 %v728
        %v765 = vunpack.c.h.b16 %v728
        %v766 = vunpack.c.l.b16 %v729
        %v767 = vunpack.c.h.b16 %v729
        %v768 = vunpack.c.l.b16 %v730
        %v769 = vunpack.c.h.b16 %v730
        %v770 = vunpack.c.l.b16 %v731
        %v771 = vunpack.c.h.b16 %v731
        %v772 = vunpack.c.l.b16 %v732
        %v773 = vunpack.c.h.b16 %v732
        %v774 = vunpack.c.l.b16 %v733
        %v775 = vunpack.c.h.b16 %v733
        %v776 = vunpack.c.l.b16 %v734
        %v777 = vunpack.c.h.b16 %v734
        %v778 = vunpack.c.l.b16 %v735
        %v779 = vunpack.c.h.b16 %v735
        %v780 = vunpack.c.l.b16 %v736
        %v781 = vunpack.c.h.b16 %v736
        %v782 = vunpack.c.l.b16 %v737
        %v783 = vunpack.c.h.b16 %v737
        %v784 = vunpack.c.l.b16 %v738
        %v785 = vunpack.c.h.b16 %v738
        %v786 = vunpack.c.l.b16 %v739
        %v787 = vunpack.c.h.b16 %v739
        %v788 = vpack.c.b16 %v758, %v756
        %v789 = vpack.c.b16 %v759, %v757
        %v790 = vpack.c.b16 %v762, %v760
        %v791 = vpack.c.b16 %v763, %v761
        %v792 = vpack.c.b16 %v766, %v764
        %v793 = vpack.c.b16 %v767, %v765
        %v794 = vpack.c.b16 %v770, %v768
        %v795 = vpack.c.b16 %v771, %v769
        %v796 = vpack.c.b16 %v774, %v772
        %v797 = vpack.c.b16 %v775, %v773
        %v798 = vpack.c.b16 %v778, %v776
        %v799 = vpack.c.b16 %v779, %v777
        %v800 = vpack.c.b16 %v782, %v780
        %v801 = vpack.c.b16 %v783, %v781
        %v802 = vpack.c.b16 %v786, %v784
        %v803 = vpack.c.b16 %v787, %v785
        %820 = vmatprep.subr.bf16.mxu0 %v789
        %821 = vmatpush1.bf16.msra.mxu0 %v788
        %822 = vmatprep.subr.bf16.mxu0 %v791
        %823 = vmatpush1.bf16.msra.mxu0 %v790
        %824 = vmatprep.subr.bf16.mxu0 %v793
        %825 = vmatpush1.bf16.msra.mxu0 %v792
        %826 = vmatprep.subr.bf16.mxu0 %v795
        %827 = vmatpush1.bf16.msra.mxu0 %v794
        %828 = vmatprep.subr.bf16.mxu0 %v797
        %829 = vmatpush1.bf16.msra.mxu0 %v796
        %830 = vmatprep.subr.bf16.mxu0 %v799
        %831 = vmatpush1.bf16.msra.mxu0 %v798
        %832 = vmatprep.subr.bf16.mxu0 %v801
        %833 = vmatpush1.bf16.msra.mxu0 %v800
        %834 = vmatprep.subr.bf16.mxu0 %v803
        %835 = vmatpush1.bf16.msra.mxu0 %v802
        %836 = vmatprep.subr.bf16.mxu0 0
        %837 = vmatpush1.bf16.msra.mxu0 0
        %838 = vmatprep.subr.bf16.mxu0 0
        %839 = vmatpush1.bf16.msra.mxu0 0
        %840 = vmatprep.subr.bf16.mxu0 0
        %841 = vmatpush1.bf16.msra.mxu0 0
        %842 = vmatprep.subr.bf16.mxu0 0
        %843 = vmatpush1.bf16.msra.mxu0 0
        %844 = vmatprep.subr.bf16.mxu0 0
        %845 = vmatpush1.bf16.msra.mxu0 0
        %846 = vmatprep.subr.bf16.mxu0 0
        %847 = vmatpush1.bf16.msra.mxu0 0
        %848 = vmatprep.subr.bf16.mxu0 0
        %849 = vmatpush1.bf16.msra.mxu0 0
        %850 = vmatprep.subr.bf16.mxu0 0
        %851 = vmatpush1.bf16.msra.mxu0 0
        %852 = vmatprep.mubr.bf16.mxu0 0
        %853 = vmatmul.mubr.bf16.gmra.mrb[0].mxu0 %v723
        %v854 = vpop.f32.mrb[0].mxu0
        %v855 = vadd.f32 0.0, %v854
        %v856 = vpop.f32.mrb[0].mxu0
        %v857 = vadd.f32 0.0, %v856
        %v858 = vpop.f32.mrb[0].mxu0
        %v859 = vadd.f32 0.0, %v858
        %v860 = vpop.f32.mrb[0].mxu0
        %v861 = vadd.f32 0.0, %v860
        %862 = vdwg.mxu0
        %v879 = vunpack.c.l.b16 %v596
        %v880 = vunpack.c.h.b16 %v596
        %v881 = vunpack.c.l.b16 %v597
        %v882 = vunpack.c.h.b16 %v597
        %v883 = vunpack.c.l.b16 %v598
        %v884 = vunpack.c.h.b16 %v598
        %v885 = vunpack.c.l.b16 %v599
        %v886 = vunpack.c.h.b16 %v599
        %v887 = vunpack.c.l.b16 %v600
        %v888 = vunpack.c.h.b16 %v600
        %v889 = vunpack.c.l.b16 %v601
        %v890 = vunpack.c.h.b16 %v601
        %v891 = vunpack.c.l.b16 %v602
        %v892 = vunpack.c.h.b16 %v602
        %v893 = vunpack.c.l.b16 %v603
        %v894 = vunpack.c.h.b16 %v603
        %v895 = vunpack.c.l.b16 %v604
        %v896 = vunpack.c.h.b16 %v604
        %v897 = vunpack.c.l.b16 %v605
        %v898 = vunpack.c.h.b16 %v605
        %v899 = vunpack.c.l.b16 %v606
        %v900 = vunpack.c.h.b16 %v606
        %v901 = vunpack.c.l.b16 %v607
        %v902 = vunpack.c.h.b16 %v607
        %v903 = vunpack.c.l.b16 %v608
        %v904 = vunpack.c.h.b16 %v608
        %v905 = vunpack.c.l.b16 %v609
        %v906 = vunpack.c.h.b16 %v609
        %v907 = vunpack.c.l.b16 %v610
        %v908 = vunpack.c.h.b16 %v610
        %v909 = vunpack.c.l.b16 %v611
        %v910 = vunpack.c.h.b16 %v611
        %v911 = vpack.c.b16 %v881, %v879
        %v912 = vpack.c.b16 %v882, %v880
        %v913 = vpack.c.b16 %v885, %v883
        %v914 = vpack.c.b16 %v886, %v884
        %v915 = vpack.c.b16 %v889, %v887
        %v916 = vpack.c.b16 %v890, %v888
        %v917 = vpack.c.b16 %v893, %v891
        %v918 = vpack.c.b16 %v894, %v892
        %v919 = vpack.c.b16 %v897, %v895
        %v920 = vpack.c.b16 %v898, %v896
        %v921 = vpack.c.b16 %v901, %v899
        %v922 = vpack.c.b16 %v902, %v900
        %v923 = vpack.c.b16 %v905, %v903
        %v924 = vpack.c.b16 %v906, %v904
        %v925 = vpack.c.b16 %v909, %v907
        %v926 = vpack.c.b16 %v910, %v908
        %943 = vmatprep.subr.bf16.mxu0 %v912
        %944 = vmatpush1.bf16.msra.mxu0 %v911
        %945 = vmatprep.subr.bf16.mxu0 %v914
        %946 = vmatpush1.bf16.msra.mxu0 %v913
        %947 = vmatprep.subr.bf16.mxu0 %v916
        %948 = vmatpush1.bf16.msra.mxu0 %v915
        %949 = vmatprep.subr.bf16.mxu0 %v918
        %950 = vmatpush1.bf16.msra.mxu0 %v917
        %951 = vmatprep.subr.bf16.mxu0 %v920
        %952 = vmatpush1.bf16.msra.mxu0 %v919
        %953 = vmatprep.subr.bf16.mxu0 %v922
        %954 = vmatpush1.bf16.msra.mxu0 %v921
        %955 = vmatprep.subr.bf16.mxu0 %v924
        %956 = vmatpush1.bf16.msra.mxu0 %v923
        %957 = vmatprep.subr.bf16.mxu0 %v926
        %958 = vmatpush1.bf16.msra.mxu0 %v925
        %959 = vmatprep.subr.bf16.mxu0 0
        %960 = vmatpush1.bf16.msra.mxu0 0
        %961 = vmatprep.subr.bf16.mxu0 0
        %962 = vmatpush1.bf16.msra.mxu0 0
        %963 = vmatprep.subr.bf16.mxu0 0
        %964 = vmatpush1.bf16.msra.mxu0 0
        %965 = vmatprep.subr.bf16.mxu0 0
        %966 = vmatpush1.bf16.msra.mxu0 0
        %967 = vmatprep.subr.bf16.mxu0 0
        %968 = vmatpush1.bf16.msra.mxu0 0
        %969 = vmatprep.subr.bf16.mxu0 0
        %970 = vmatpush1.bf16.msra.mxu0 0
        %971 = vmatprep.subr.bf16.mxu0 0
        %972 = vmatpush1.bf16.msra.mxu0 0
        %973 = vmatprep.subr.bf16.mxu0 0
        %974 = vmatpush1.bf16.msra.mxu0 0
        %975 = vmatprep.mubr.bf16.mxu0 0
        %976 = vmatmul.mubr.bf16.gmra.mrb[0].mxu0 %v595
        %v977 = vpop.f32.mrb[0].mxu0
        %v978 = vadd.f32 %v855, %v977
        %v979 = vpop.f32.mrb[0].mxu0
        %v980 = vadd.f32 %v857, %v979
        %v981 = vpop.f32.mrb[0].mxu0
        %v982 = vadd.f32 %v859, %v981
        %v983 = vpop.f32.mrb[0].mxu0
        %v984 = vadd.f32 %v861, %v983
        %985 = vdwg.mxu0
        %v986 = vadd.f32 %v978, %v477
        %v987 = vadd.f32 %v980, %v478
        %v988 = vadd.f32 %v982, %v479
        %v989 = vadd.f32 %v984, %v480
        %v990 = vld [vmem:[%s2] sm:$0x3]
        %v991 = vld [vmem:[%s3] sm:$0x3]
        %v992 = vadd.f32 %v986, %v987
        %993 = vadd.xlane.f32.xlu0 %v992
        %v994 = vpop.xlane.xlu0 %993
        %v995 = vadd.f32 %v988, %v989
        %996 = vadd.xlane.f32.xlu0 %v995
        %v997 = vpop.xlane.xlu0 %996
        %v998 = vrcp.pop 256.0
        %v999 = vmul.f32 %v994, %v998
        %v1000 = vmul.f32 %v997, %v998
        %v1001 = vsub.f32 %v986, %v999
        %v1002 = vsub.f32 %v987, %v999
        %v1003 = vsub.f32 %v988, %v1000
        %v1004 = vsub.f32 %v989, %v1000
        %v1005 = vmul.f32 %v1001, %v1001
        %v1006 = vmul.f32 %v1002, %v1002
        %v1007 = vmul.f32 %v1003, %v1003
        %v1008 = vmul.f32 %v1004, %v1004
        %v1009 = vadd.f32 %v1005, %v1006
        %1010 = vadd.xlane.f32.xlu0 %v1009
        %v1011 = vpop.xlane.xlu0 %1010
        %v1012 = vadd.f32 %v1007, %v1008
        %1013 = vadd.xlane.f32.xlu0 %v1012
        %v1014 = vpop.xlane.xlu0 %1013
        %v1015 = vmul.f32 %v1011, 0.003921569
        %v1016 = vmul.f32 %v1014, 0.003921569
        %v1017 = vrsqrt.pop %v1015
        %v1018 = vmul.f32 %v1015, %v1017
        %vm1019 = vcmp.eq.f32.partialorder %v1015, inf
        %v1020 = vsel %vm1019, %v1015, %v1018
        %vm1021 = vcmp.eq.f32.partialorder %v1015, 0.0
        %v1022 = vand.u32 %v1015, 2147483648
        %v1023 = vsel %vm1021, %v1022, %v1020
        %v1024 = vrsqrt.pop %v1016
        %v1025 = vmul.f32 %v1016, %v1024
        %vm1026 = vcmp.eq.f32.partialorder %v1016, inf
        %v1027 = vsel %vm1026, %v1016, %v1025
        %vm1028 = vcmp.eq.f32.partialorder %v1016, 0.0
        %v1029 = vand.u32 %v1016, 2147483648
        %v1030 = vsel %vm1028, %v1029, %v1027
        %v1031 = vadd.f32 %v1023, 1e-06
        %v1032 = vadd.f32 %v1030, 1e-06
        %v1033 = vrcp.pop %v1031
        %v1034 = vrcp.pop %v1032
        %v1035 = vmul.f32 %v1001, %v1033
        %v1036 = vmul.f32 %v1002, %v1033
        %v1037 = vmul.f32 %v1003, %v1034
        %v1038 = vmul.f32 %v1004, %v1034
        %v1040 = vlaneseq
        %v1041 = vshrl.u32 %v1040, 7
        %v1042 = vsub.s32 0, %v1041
        %v1043 = vrot.slane %v990, %v1042
        %v1044 = vlaneseq
        %v1045 = vshrl.u32 %v1044, 7
        %v1046 = vsub.s32 1, %v1045
        %v1047 = vrot.slane %v990, %v1046
        %v1050 = vmul.f32 %v1043, %v1035
        %v1051 = vmul.f32 %v1047, %v1036
        %v1052 = vmul.f32 %v1043, %v1037
        %v1053 = vmul.f32 %v1047, %v1038
        %v1055 = vlaneseq
        %v1056 = vshrl.u32 %v1055, 7
        %v1057 = vsub.s32 0, %v1056
        %v1058 = vrot.slane %v991, %v1057
        %v1059 = vlaneseq
        %v1060 = vshrl.u32 %v1059, 7
        %v1061 = vsub.s32 1, %v1060
        %v1062 = vrot.slane %v991, %v1061
        %v1065 = vadd.f32 %v1050, %v1058
        %v1066 = vadd.f32 %v1051, %v1062
        %v1067 = vadd.f32 %v1052, %v1058
        %v1068 = vadd.f32 %v1053, %v1062
        %v1069 = vpack.c.bf16 %v1067, %v1065
        %v1070 = vpack.c.bf16 %v1068, %v1066
        %v1071 = vld [vmem:[#allocation7] sm:$0xff]
        %v1072 = vld [vmem:[#allocation7 + $0x8] sm:$0xff]
        %v1073 = vld [vmem:[#allocation7 + $0x10] sm:$0xff]
        %v1074 = vld [vmem:[#allocation7 + $0x18] sm:$0xff]
        %v1075 = vld [vmem:[#allocation7 + $0x20] sm:$0xff]
        %v1076 = vld [vmem:[#allocation7 + $0x28] sm:$0xff]
        %v1077 = vld [vmem:[#allocation7 + $0x30] sm:$0xff]
        %v1078 = vld [vmem:[#allocation7 + $0x38] sm:$0xff]
        %v1079 = vld [vmem:[#allocation7 + $0x40] sm:$0xff]
        %v1080 = vld [vmem:[#allocation7 + $0x48] sm:$0xff]
        %v1081 = vld [vmem:[#allocation7 + $0x50] sm:$0xff]
        %v1082 = vld [vmem:[#allocation7 + $0x58] sm:$0xff]
        %v1083 = vld [vmem:[#allocation7 + $0x60] sm:$0xff]
        %v1084 = vld [vmem:[#allocation7 + $0x68] sm:$0xff]
        %v1085 = vld [vmem:[#allocation7 + $0x70] sm:$0xff]
        %v1086 = vld [vmem:[#allocation7 + $0x78] sm:$0xff]
        %v1087 = vld [vmem:[#allocation7 + $0x80] sm:$0xff]
        %v1088 = vld [vmem:[#allocation7 + $0x88] sm:$0xff]
        %v1089 = vld [vmem:[#allocation7 + $0x90] sm:$0xff]
        %v1090 = vld [vmem:[#allocation7 + $0x98] sm:$0xff]
        %v1091 = vld [vmem:[#allocation7 + $0xa0] sm:$0xff]
        %v1092 = vld [vmem:[#allocation7 + $0xa8] sm:$0xff]
        %v1093 = vld [vmem:[#allocation7 + $0xb0] sm:$0xff]
        %v1094 = vld [vmem:[#allocation7 + $0xb8] sm:$0xff]
        %v1095 = vld [vmem:[#allocation7 + $0xc0] sm:$0xff]
        %v1096 = vld [vmem:[#allocation7 + $0xc8] sm:$0xff]
        %v1097 = vld [vmem:[#allocation7 + $0xd0] sm:$0xff]
        %v1098 = vld [vmem:[#allocation7 + $0xd8] sm:$0xff]
        %v1099 = vld [vmem:[#allocation7 + $0xe0] sm:$0xff]
        %v1100 = vld [vmem:[#allocation7 + $0xe8] sm:$0xff]
        %v1101 = vld [vmem:[#allocation7 + $0xf0] sm:$0xff]
        %v1102 = vld [vmem:[#allocation7 + $0xf8] sm:$0xff]
        %v1103 = vld [vmem:[#allocation7 + $0x100] sm:$0xff]
        %v1104 = vld [vmem:[#allocation7 + $0x108] sm:$0xff]
        %v1105 = vld [vmem:[#allocation7 + $0x110] sm:$0xff]
        %v1106 = vld [vmem:[#allocation7 + $0x118] sm:$0xff]
        %v1107 = vld [vmem:[#allocation7 + $0x120] sm:$0xff]
        %v1108 = vld [vmem:[#allocation7 + $0x128] sm:$0xff]
        %v1109 = vld [vmem:[#allocation7 + $0x130] sm:$0xff]
        %v1110 = vld [vmem:[#allocation7 + $0x138] sm:$0xff]
        %v1111 = vld [vmem:[#allocation7 + $0x140] sm:$0xff]
        %v1112 = vld [vmem:[#allocation7 + $0x148] sm:$0xff]
        %v1113 = vld [vmem:[#allocation7 + $0x150] sm:$0xff]
        %v1114 = vld [vmem:[#allocation7 + $0x158] sm:$0xff]
        %v1115 = vld [vmem:[#allocation7 + $0x160] sm:$0xff]
        %v1116 = vld [vmem:[#allocation7 + $0x168] sm:$0xff]
        %v1117 = vld [vmem:[#allocation7 + $0x170] sm:$0xff]
        %v1118 = vld [vmem:[#allocation7 + $0x178] sm:$0xff]
        %v1119 = vld [vmem:[#allocation7 + $0x180] sm:$0xff]
        %v1120 = vld [vmem:[#allocation7 + $0x188] sm:$0xff]
        %v1121 = vld [vmem:[#allocation7 + $0x190] sm:$0xff]
        %v1122 = vld [vmem:[#allocation7 + $0x198] sm:$0xff]
        %v1123 = vld [vmem:[#allocation7 + $0x1a0] sm:$0xff]
        %v1124 = vld [vmem:[#allocation7 + $0x1a8] sm:$0xff]
        %v1125 = vld [vmem:[#allocation7 + $0x1b0] sm:$0xff]
        %v1126 = vld [vmem:[#allocation7 + $0x1b8] sm:$0xff]
        %v1127 = vld [vmem:[#allocation7 + $0x1c0] sm:$0xff]
        %v1128 = vld [vmem:[#allocation7 + $0x1c8] sm:$0xff]
        %v1129 = vld [vmem:[#allocation7 + $0x1d0] sm:$0xff]
        %v1130 = vld [vmem:[#allocation7 + $0x1d8] sm:$0xff]
        %v1131 = vld [vmem:[#allocation7 + $0x1e0] sm:$0xff]
        %v1132 = vld [vmem:[#allocation7 + $0x1e8] sm:$0xff]
        %v1133 = vld [vmem:[#allocation7 + $0x1f0] sm:$0xff]
        %v1134 = vld [vmem:[#allocation7 + $0x1f8] sm:$0xff]
        %v1135 = vld [vmem:[%s5] sm:$0xf]
        %v1137 = vlaneseq
        %v1138 = vshrl.u32 %v1137, 7
        %v1139 = vsub.s32 0, %v1138
        %v1140 = vrot.slane %v1135, %v1139
        %v1141 = vlaneseq
        %v1142 = vshrl.u32 %v1141, 7
        %v1143 = vsub.s32 1, %v1142
        %v1144 = vrot.slane %v1135, %v1143
        %v1145 = vlaneseq
        %v1146 = vshrl.u32 %v1145, 7
        %v1147 = vsub.s32 2, %v1146
        %v1148 = vrot.slane %v1135, %v1147
        %v1149 = vlaneseq
        %v1150 = vshrl.u32 %v1149, 7
        %v1151 = vsub.s32 3, %v1150
        %v1152 = vrot.slane %v1135, %v1151
        %v1221 = vunpack.c.l.b16 %v1071
        %v1222 = vunpack.c.h.b16 %v1071
        %v1223 = vunpack.c.l.b16 %v1072
        %v1224 = vunpack.c.h.b16 %v1072
        %v1225 = vunpack.c.l.b16 %v1073
        %v1226 = vunpack.c.h.b16 %v1073
        %v1227 = vunpack.c.l.b16 %v1074
        %v1228 = vunpack.c.h.b16 %v1074
        %v1229 = vunpack.c.l.b16 %v1075
        %v1230 = vunpack.c.h.b16 %v1075
        %v1231 = vunpack.c.l.b16 %v1076
        %v1232 = vunpack.c.h.b16 %v1076
        %v1233 = vunpack.c.l.b16 %v1077
        %v1234 = vunpack.c.h.b16 %v1077
        %v1235 = vunpack.c.l.b16 %v1078
        %v1236 = vunpack.c.h.b16 %v1078
        %v1237 = vunpack.c.l.b16 %v1079
        %v1238 = vunpack.c.h.b16 %v1079
        %v1239 = vunpack.c.l.b16 %v1080
        %v1240 = vunpack.c.h.b16 %v1080
        %v1241 = vunpack.c.l.b16 %v1081
        %v1242 = vunpack.c.h.b16 %v1081
        %v1243 = vunpack.c.l.b16 %v1082
        %v1244 = vunpack.c.h.b16 %v1082
        %v1245 = vunpack.c.l.b16 %v1083
        %v1246 = vunpack.c.h.b16 %v1083
        %v1247 = vunpack.c.l.b16 %v1084
        %v1248 = vunpack.c.h.b16 %v1084
        %v1249 = vunpack.c.l.b16 %v1085
        %v1250 = vunpack.c.h.b16 %v1085
        %v1251 = vunpack.c.l.b16 %v1086
        %v1252 = vunpack.c.h.b16 %v1086
        %v1253 = vunpack.c.l.b16 %v1087
        %v1254 = vunpack.c.h.b16 %v1087
        %v1255 = vunpack.c.l.b16 %v1088
        %v1256 = vunpack.c.h.b16 %v1088
        %v1257 = vunpack.c.l.b16 %v1089
        %v1258 = vunpack.c.h.b16 %v1089
        %v1259 = vunpack.c.l.b16 %v1090
        %v1260 = vunpack.c.h.b16 %v1090
        %v1261 = vunpack.c.l.b16 %v1091
        %v1262 = vunpack.c.h.b16 %v1091
        %v1263 = vunpack.c.l.b16 %v1092
        %v1264 = vunpack.c.h.b16 %v1092
        %v1265 = vunpack.c.l.b16 %v1093
        %v1266 = vunpack.c.h.b16 %v1093
        %v1267 = vunpack.c.l.b16 %v1094
        %v1268 = vunpack.c.h.b16 %v1094
        %v1269 = vunpack.c.l.b16 %v1095
        %v1270 = vunpack.c.h.b16 %v1095
        %v1271 = vunpack.c.l.b16 %v1096
        %v1272 = vunpack.c.h.b16 %v1096
        %v1273 = vunpack.c.l.b16 %v1097
        %v1274 = vunpack.c.h.b16 %v1097
        %v1275 = vunpack.c.l.b16 %v1098
        %v1276 = vunpack.c.h.b16 %v1098
        %v1277 = vunpack.c.l.b16 %v1099
        %v1278 = vunpack.c.h.b16 %v1099
        %v1279 = vunpack.c.l.b16 %v1100
        %v1280 = vunpack.c.h.b16 %v1100
        %v1281 = vunpack.c.l.b16 %v1101
        %v1282 = vunpack.c.h.b16 %v1101
        %v1283 = vunpack.c.l.b16 %v1102
        %v1284 = vunpack.c.h.b16 %v1102
        %v1285 = vunpack.c.l.b16 %v1103
        %v1286 = vunpack.c.h.b16 %v1103
        %v1287 = vunpack.c.l.b16 %v1104
        %v1288 = vunpack.c.h.b16 %v1104
        %v1289 = vunpack.c.l.b16 %v1105
        %v1290 = vunpack.c.h.b16 %v1105
        %v1291 = vunpack.c.l.b16 %v1106
        %v1292 = vunpack.c.h.b16 %v1106
        %v1293 = vunpack.c.l.b16 %v1107
        %v1294 = vunpack.c.h.b16 %v1107
        %v1295 = vunpack.c.l.b16 %v1108
        %v1296 = vunpack.c.h.b16 %v1108
        %v1297 = vunpack.c.l.b16 %v1109
        %v1298 = vunpack.c.h.b16 %v1109
        %v1299 = vunpack.c.l.b16 %v1110
        %v1300 = vunpack.c.h.b16 %v1110
        %v1301 = vunpack.c.l.b16 %v1111
        %v1302 = vunpack.c.h.b16 %v1111
        %v1303 = vunpack.c.l.b16 %v1112
        %v1304 = vunpack.c.h.b16 %v1112
        %v1305 = vunpack.c.l.b16 %v1113
        %v1306 = vunpack.c.h.b16 %v1113
        %v1307 = vunpack.c.l.b16 %v1114
        %v1308 = vunpack.c.h.b16 %v1114
        %v1309 = vunpack.c.l.b16 %v1115
        %v1310 = vunpack.c.h.b16 %v1115
        %v1311 = vunpack.c.l.b16 %v1116
        %v1312 = vunpack.c.h.b16 %v1116
        %v1313 = vunpack.c.l.b16 %v1117
        %v1314 = vunpack.c.h.b16 %v1117
        %v1315 = vunpack.c.l.b16 %v1118
        %v1316 = vunpack.c.h.b16 %v1118
        %v1317 = vunpack.c.l.b16 %v1119
        %v1318 = vunpack.c.h.b16 %v1119
        %v1319 = vunpack.c.l.b16 %v1120
        %v1320 = vunpack.c.h.b16 %v1120
        %v1321 = vunpack.c.l.b16 %v1121
        %v1322 = vunpack.c.h.b16 %v1121
        %v1323 = vunpack.c.l.b16 %v1122
        %v1324 = vunpack.c.h.b16 %v1122
        %v1325 = vunpack.c.l.b16 %v1123
        %v1326 = vunpack.c.h.b16 %v1123
        %v1327 = vunpack.c.l.b16 %v1124
        %v1328 = vunpack.c.h.b16 %v1124
        %v1329 = vunpack.c.l.b16 %v1125
        %v1330 = vunpack.c.h.b16 %v1125
        %v1331 = vunpack.c.l.b16 %v1126
        %v1332 = vunpack.c.h.b16 %v1126
        %v1333 = vunpack.c.l.b16 %v1127
        %v1334 = vunpack.c.h.b16 %v1127
        %v1335 = vunpack.c.l.b16 %v1128
        %v1336 = vunpack.c.h.b16 %v1128
        %v1337 = vunpack.c.l.b16 %v1129
        %v1338 = vunpack.c.h.b16 %v1129
        %v1339 = vunpack.c.l.b16 %v1130
        %v1340 = vunpack.c.h.b16 %v1130
        %v1341 = vunpack.c.l.b16 %v1131
        %v1342 = vunpack.c.h.b16 %v1131
        %v1343 = vunpack.c.l.b16 %v1132
        %v1344 = vunpack.c.h.b16 %v1132
        %v1345 = vunpack.c.l.b16 %v1133
        %v1346 = vunpack.c.h.b16 %v1133
        %v1347 = vunpack.c.l.b16 %v1134
        %v1348 = vunpack.c.h.b16 %v1134
        %v1349 = vpack.c.b16 %v1225, %v1221
        %v1350 = vpack.c.b16 %v1226, %v1222
        %v1351 = vpack.c.b16 %v1227, %v1223
        %v1352 = vpack.c.b16 %v1228, %v1224
        %v1353 = vpack.c.b16 %v1233, %v1229
        %v1354 = vpack.c.b16 %v1234, %v1230
        %v1355 = vpack.c.b16 %v1235, %v1231
        %v1356 = vpack.c.b16 %v1236, %v1232
        %v1357 = vpack.c.b16 %v1241, %v1237
        %v1358 = vpack.c.b16 %v1242, %v1238
        %v1359 = vpack.c.b16 %v1243, %v1239
        %v1360 = vpack.c.b16 %v1244, %v1240
        %v1361 = vpack.c.b16 %v1249, %v1245
        %v1362 = vpack.c.b16 %v1250, %v1246
        %v1363 = vpack.c.b16 %v1251, %v1247
        %v1364 = vpack.c.b16 %v1252, %v1248
        %v1365 = vpack.c.b16 %v1257, %v1253
        %v1366 = vpack.c.b16 %v1258, %v1254
        %v1367 = vpack.c.b16 %v1259, %v1255
        %v1368 = vpack.c.b16 %v1260, %v1256
        %v1369 = vpack.c.b16 %v1265, %v1261
        %v1370 = vpack.c.b16 %v1266, %v1262
        %v1371 = vpack.c.b16 %v1267, %v1263
        %v1372 = vpack.c.b16 %v1268, %v1264
        %v1373 = vpack.c.b16 %v1273, %v1269
        %v1374 = vpack.c.b16 %v1274, %v1270
        %v1375 = vpack.c.b16 %v1275, %v1271
        %v1376 = vpack.c.b16 %v1276, %v1272
        %v1377 = vpack.c.b16 %v1281, %v1277
        %v1378 = vpack.c.b16 %v1282, %v1278
        %v1379 = vpack.c.b16 %v1283, %v1279
        %v1380 = vpack.c.b16 %v1284, %v1280
        %v1381 = vpack.c.b16 %v1289, %v1285
        %v1382 = vpack.c.b16 %v1290, %v1286
        %v1383 = vpack.c.b16 %v1291, %v1287
        %v1384 = vpack.c.b16 %v1292, %v1288
        %v1385 = vpack.c.b16 %v1297, %v1293
        %v1386 = vpack.c.b16 %v1298, %v1294
        %v1387 = vpack.c.b16 %v1299, %v1295
        %v1388 = vpack.c.b16 %v1300, %v1296
        %v1389 = vpack.c.b16 %v1305, %v1301
        %v1390 = vpack.c.b16 %v1306, %v1302
        %v1391 = vpack.c.b16 %v1307, %v1303
        %v1392 = vpack.c.b16 %v1308, %v1304
        %v1393 = vpack.c.b16 %v1313, %v1309
        %v1394 = vpack.c.b16 %v1314, %v1310
        %v1395 = vpack.c.b16 %v1315, %v1311
        %v1396 = vpack.c.b16 %v1316, %v1312
        %v1397 = vpack.c.b16 %v1321, %v1317
        %v1398 = vpack.c.b16 %v1322, %v1318
        %v1399 = vpack.c.b16 %v1323, %v1319
        %v1400 = vpack.c.b16 %v1324, %v1320
        %v1401 = vpack.c.b16 %v1329, %v1325
        %v1402 = vpack.c.b16 %v1330, %v1326
        %v1403 = vpack.c.b16 %v1331, %v1327
        %v1404 = vpack.c.b16 %v1332, %v1328
        %v1405 = vpack.c.b16 %v1337, %v1333
        %v1406 = vpack.c.b16 %v1338, %v1334
        %v1407 = vpack.c.b16 %v1339, %v1335
        %v1408 = vpack.c.b16 %v1340, %v1336
        %v1409 = vpack.c.b16 %v1345, %v1341
        %v1410 = vpack.c.b16 %v1346, %v1342
        %v1411 = vpack.c.b16 %v1347, %v1343
        %v1412 = vpack.c.b16 %v1348, %v1344
        %1477 = vmatprep.subr.bf16.mxu0 %v1350
        %1478 = vmatpush1.bf16.msra.mxu0 %v1349
        %1479 = vmatprep.subr.bf16.mxu0 %v1354
        %1480 = vmatpush1.bf16.msra.mxu0 %v1353
        %1481 = vmatprep.subr.bf16.mxu0 %v1358
        %1482 = vmatpush1.bf16.msra.mxu0 %v1357
        %1483 = vmatprep.subr.bf16.mxu0 %v1362
        %1484 = vmatpush1.bf16.msra.mxu0 %v1361
        %1485 = vmatprep.subr.bf16.mxu0 %v1366
        %1486 = vmatpush1.bf16.msra.mxu0 %v1365
        %1487 = vmatprep.subr.bf16.mxu0 %v1370
        %1488 = vmatpush1.bf16.msra.mxu0 %v1369
        %1489 = vmatprep.subr.bf16.mxu0 %v1374
        %1490 = vmatpush1.bf16.msra.mxu0 %v1373
        %1491 = vmatprep.subr.bf16.mxu0 %v1378
        %1492 = vmatpush1.bf16.msra.mxu0 %v1377
        %1493 = vmatprep.subr.bf16.mxu0 %v1382
        %1494 = vmatpush1.bf16.msra.mxu0 %v1381
        %1495 = vmatprep.subr.bf16.mxu0 %v1386
        %1496 = vmatpush1.bf16.msra.mxu0 %v1385
        %1497 = vmatprep.subr.bf16.mxu0 %v1390
        %1498 = vmatpush1.bf16.msra.mxu0 %v1389
        %1499 = vmatprep.subr.bf16.mxu0 %v1394
        %1500 = vmatpush1.bf16.msra.mxu0 %v1393
        %1501 = vmatprep.subr.bf16.mxu0 %v1398
        %1502 = vmatpush1.bf16.msra.mxu0 %v1397
        %1503 = vmatprep.subr.bf16.mxu0 %v1402
        %1504 = vmatpush1.bf16.msra.mxu0 %v1401
        %1505 = vmatprep.subr.bf16.mxu0 %v1406
        %1506 = vmatpush1.bf16.msra.mxu0 %v1405
        %1507 = vmatprep.subr.bf16.mxu0 %v1410
        %1508 = vmatpush1.bf16.msra.mxu0 %v1409
        %1509 = vmatprep.mubr.bf16.mxu0 %v1070
        %1510 = vmatmul.mubr.bf16.gmra.mrb[0].mxu0 %v1069
        %v1511 = vpop.f32.mrb[0].mxu0
        %v1512 = vadd.f32 %v1140, %v1511
        %v1513 = vpop.f32.mrb[0].mxu0
        %v1514 = vadd.f32 %v1144, %v1513
        %v1515 = vpop.f32.mrb[0].mxu0
        %v1516 = vadd.f32 %v1140, %v1515
        %v1517 = vpop.f32.mrb[0].mxu0
        %v1518 = vadd.f32 %v1144, %v1517
        %1519 = vdwg.mxu0
        %1520 = vmatprep.subr.bf16.mxu0 %v1352
        %1521 = vmatpush1.bf16.msra.mxu0 %v1351
        %1522 = vmatprep.subr.bf16.mxu0 %v1356
        %1523 = vmatpush1.bf16.msra.mxu0 %v1355
        %1524 = vmatprep.subr.bf16.mxu0 %v1360
        %1525 = vmatpush1.bf16.msra.mxu0 %v1359
        %1526 = vmatprep.subr.bf16.mxu0 %v1364
        %1527 = vmatpush1.bf16.msra.mxu0 %v1363
        %1528 = vmatprep.subr.bf16.mxu0 %v1368
        %1529 = vmatpush1.bf16.msra.mxu0 %v1367
        %1530 = vmatprep.subr.bf16.mxu0 %v1372
        %1531 = vmatpush1.bf16.msra.mxu0 %v1371
        %1532 = vmatprep.subr.bf16.mxu0 %v1376
        %1533 = vmatpush1.bf16.msra.mxu0 %v1375
        %1534 = vmatprep.subr.bf16.mxu0 %v1380
        %1535 = vmatpush1.bf16.msra.mxu0 %v1379
        %1536 = vmatprep.subr.bf16.mxu0 %v1384
        %1537 = vmatpush1.bf16.msra.mxu0 %v1383
        %1538 = vmatprep.subr.bf16.mxu0 %v1388
        %1539 = vmatpush1.bf16.msra.mxu0 %v1387
        %1540 = vmatprep.subr.bf16.mxu0 %v1392
        %1541 = vmatpush1.bf16.msra.mxu0 %v1391
        %1542 = vmatprep.subr.bf16.mxu0 %v1396
        %1543 = vmatpush1.bf16.msra.mxu0 %v1395
        %1544 = vmatprep.subr.bf16.mxu0 %v1400
        %1545 = vmatpush1.bf16.msra.mxu0 %v1399
        %1546 = vmatprep.subr.bf16.mxu0 %v1404
        %1547 = vmatpush1.bf16.msra.mxu0 %v1403
        %1548 = vmatprep.subr.bf16.mxu0 %v1408
        %1549 = vmatpush1.bf16.msra.mxu0 %v1407
        %1550 = vmatprep.subr.bf16.mxu0 %v1412
        %1551 = vmatpush1.bf16.msra.mxu0 %v1411
        %1552 = vmatprep.mubr.bf16.mxu0 %v1070
        %1553 = vmatmul.mubr.bf16.gmra.mrb[0].mxu0 %v1069
        %v1554 = vpop.f32.mrb[0].mxu0
        %v1555 = vadd.f32 %v1148, %v1554
        %v1556 = vpop.f32.mrb[0].mxu0
        %v1557 = vadd.f32 %v1152, %v1556
        %v1558 = vpop.f32.mrb[0].mxu0
        %v1559 = vadd.f32 %v1148, %v1558
        %v1560 = vpop.f32.mrb[0].mxu0
        %v1561 = vadd.f32 %v1152, %v1560
        %1562 = vdwg.mxu0
        %v1563 = vmax.f32 %v1512, 0.0
        %v1564 = vmax.f32 %v1514, 0.0
        %v1565 = vmax.f32 %v1555, 0.0
        %v1566 = vmax.f32 %v1557, 0.0
        %v1567 = vmax.f32 %v1516, 0.0
        %v1568 = vmax.f32 %v1518, 0.0
        %v1569 = vmax.f32 %v1559, 0.0
        %v1570 = vmax.f32 %v1561, 0.0
        %v1571 = vpack.c.bf16 %v1567, %v1563
        %v1572 = vpack.c.bf16 %v1568, %v1564
        %v1573 = vpack.c.bf16 %v1569, %v1565
        %v1574 = vpack.c.bf16 %v1570, %v1566
        %v1575 = vld [vmem:[#allocation8] sm:$0xff]
        %v1576 = vld [vmem:[#allocation8 + $0x8] sm:$0xff]
        %v1577 = vld [vmem:[#allocation8 + $0x10] sm:$0xff]
        %v1578 = vld [vmem:[#allocation8 + $0x18] sm:$0xff]
        %v1579 = vld [vmem:[#allocation8 + $0x20] sm:$0xff]
        %v1580 = vld [vmem:[#allocation8 + $0x28] sm:$0xff]
        %v1581 = vld [vmem:[#allocation8 + $0x30] sm:$0xff]
        %v1582 = vld [vmem:[#allocation8 + $0x38] sm:$0xff]
        %v1583 = vld [vmem:[#allocation8 + $0x40] sm:$0xff]
        %v1584 = vld [vmem:[#allocation8 + $0x48] sm:$0xff]
        %v1585 = vld [vmem:[#allocation8 + $0x50] sm:$0xff]
        %v1586 = vld [vmem:[#allocation8 + $0x58] sm:$0xff]
        %v1587 = vld [vmem:[#allocation8 + $0x60] sm:$0xff]
        %v1588 = vld [vmem:[#allocation8 + $0x68] sm:$0xff]
        %v1589 = vld [vmem:[#allocation8 + $0x70] sm:$0xff]
        %v1590 = vld [vmem:[#allocation8 + $0x78] sm:$0xff]
        %v1591 = vld [vmem:[#allocation8 + $0x80] sm:$0xff]
        %v1592 = vld [vmem:[#allocation8 + $0x88] sm:$0xff]
        %v1593 = vld [vmem:[#allocation8 + $0x90] sm:$0xff]
        %v1594 = vld [vmem:[#allocation8 + $0x98] sm:$0xff]
        %v1595 = vld [vmem:[#allocation8 + $0xa0] sm:$0xff]
        %v1596 = vld [vmem:[#allocation8 + $0xa8] sm:$0xff]
        %v1597 = vld [vmem:[#allocation8 + $0xb0] sm:$0xff]
        %v1598 = vld [vmem:[#allocation8 + $0xb8] sm:$0xff]
        %v1599 = vld [vmem:[#allocation8 + $0xc0] sm:$0xff]
        %v1600 = vld [vmem:[#allocation8 + $0xc8] sm:$0xff]
        %v1601 = vld [vmem:[#allocation8 + $0xd0] sm:$0xff]
        %v1602 = vld [vmem:[#allocation8 + $0xd8] sm:$0xff]
        %v1603 = vld [vmem:[#allocation8 + $0xe0] sm:$0xff]
        %v1604 = vld [vmem:[#allocation8 + $0xe8] sm:$0xff]
        %v1605 = vld [vmem:[#allocation8 + $0xf0] sm:$0xff]
        %v1606 = vld [vmem:[#allocation8 + $0xf8] sm:$0xff]
        %v1607 = vld [vmem:[#allocation8 + $0x100] sm:$0xff]
        %v1608 = vld [vmem:[#allocation8 + $0x108] sm:$0xff]
        %v1609 = vld [vmem:[#allocation8 + $0x110] sm:$0xff]
        %v1610 = vld [vmem:[#allocation8 + $0x118] sm:$0xff]
        %v1611 = vld [vmem:[#allocation8 + $0x120] sm:$0xff]
        %v1612 = vld [vmem:[#allocation8 + $0x128] sm:$0xff]
        %v1613 = vld [vmem:[#allocation8 + $0x130] sm:$0xff]
        %v1614 = vld [vmem:[#allocation8 + $0x138] sm:$0xff]
        %v1615 = vld [vmem:[#allocation8 + $0x140] sm:$0xff]
        %v1616 = vld [vmem:[#allocation8 + $0x148] sm:$0xff]
        %v1617 = vld [vmem:[#allocation8 + $0x150] sm:$0xff]
        %v1618 = vld [vmem:[#allocation8 + $0x158] sm:$0xff]
        %v1619 = vld [vmem:[#allocation8 + $0x160] sm:$0xff]
        %v1620 = vld [vmem:[#allocation8 + $0x168] sm:$0xff]
        %v1621 = vld [vmem:[#allocation8 + $0x170] sm:$0xff]
        %v1622 = vld [vmem:[#allocation8 + $0x178] sm:$0xff]
        %v1623 = vld [vmem:[#allocation8 + $0x180] sm:$0xff]
        %v1624 = vld [vmem:[#allocation8 + $0x188] sm:$0xff]
        %v1625 = vld [vmem:[#allocation8 + $0x190] sm:$0xff]
        %v1626 = vld [vmem:[#allocation8 + $0x198] sm:$0xff]
        %v1627 = vld [vmem:[#allocation8 + $0x1a0] sm:$0xff]
        %v1628 = vld [vmem:[#allocation8 + $0x1a8] sm:$0xff]
        %v1629 = vld [vmem:[#allocation8 + $0x1b0] sm:$0xff]
        %v1630 = vld [vmem:[#allocation8 + $0x1b8] sm:$0xff]
        %v1631 = vld [vmem:[#allocation8 + $0x1c0] sm:$0xff]
        %v1632 = vld [vmem:[#allocation8 + $0x1c8] sm:$0xff]
        %v1633 = vld [vmem:[#allocation8 + $0x1d0] sm:$0xff]
        %v1634 = vld [vmem:[#allocation8 + $0x1d8] sm:$0xff]
        %v1635 = vld [vmem:[#allocation8 + $0x1e0] sm:$0xff]
        %v1636 = vld [vmem:[#allocation8 + $0x1e8] sm:$0xff]
        %v1637 = vld [vmem:[#allocation8 + $0x1f0] sm:$0xff]
        %v1638 = vld [vmem:[#allocation8 + $0x1f8] sm:$0xff]
        %v1639 = vld [vmem:[%s7] sm:$0x3]
        %v1641 = vlaneseq
        %v1642 = vshrl.u32 %v1641, 7
        %v1643 = vsub.s32 0, %v1642
        %v1644 = vrot.slane %v1639, %v1643
        %v1645 = vlaneseq
        %v1646 = vshrl.u32 %v1645, 7
        %v1647 = vsub.s32 1, %v1646
        %v1648 = vrot.slane %v1639, %v1647
        %v1715 = vunpack.c.l.b16 %v1575
        %v1716 = vunpack.c.h.b16 %v1575
        %v1717 = vunpack.c.l.b16 %v1576
        %v1718 = vunpack.c.h.b16 %v1576
        %v1719 = vunpack.c.l.b16 %v1577
        %v1720 = vunpack.c.h.b16 %v1577
        %v1721 = vunpack.c.l.b16 %v1578
        %v1722 = vunpack.c.h.b16 %v1578
        %v1723 = vunpack.c.l.b16 %v1579
        %v1724 = vunpack.c.h.b16 %v1579
        %v1725 = vunpack.c.l.b16 %v1580
        %v1726 = vunpack.c.h.b16 %v1580
        %v1727 = vunpack.c.l.b16 %v1581
        %v1728 = vunpack.c.h.b16 %v1581
        %v1729 = vunpack.c.l.b16 %v1582
        %v1730 = vunpack.c.h.b16 %v1582
        %v1731 = vunpack.c.l.b16 %v1583
        %v1732 = vunpack.c.h.b16 %v1583
        %v1733 = vunpack.c.l.b16 %v1584
        %v1734 = vunpack.c.h.b16 %v1584
        %v1735 = vunpack.c.l.b16 %v1585
        %v1736 = vunpack.c.h.b16 %v1585
        %v1737 = vunpack.c.l.b16 %v1586
        %v1738 = vunpack.c.h.b16 %v1586
        %v1739 = vunpack.c.l.b16 %v1587
        %v1740 = vunpack.c.h.b16 %v1587
        %v1741 = vunpack.c.l.b16 %v1588
        %v1742 = vunpack.c.h.b16 %v1588
        %v1743 = vunpack.c.l.b16 %v1589
        %v1744 = vunpack.c.h.b16 %v1589
        %v1745 = vunpack.c.l.b16 %v1590
        %v1746 = vunpack.c.h.b16 %v1590
        %v1747 = vunpack.c.l.b16 %v1591
        %v1748 = vunpack.c.h.b16 %v1591
        %v1749 = vunpack.c.l.b16 %v1592
        %v1750 = vunpack.c.h.b16 %v1592
        %v1751 = vunpack.c.l.b16 %v1593
        %v1752 = vunpack.c.h.b16 %v1593
        %v1753 = vunpack.c.l.b16 %v1594
        %v1754 = vunpack.c.h.b16 %v1594
        %v1755 = vunpack.c.l.b16 %v1595
        %v1756 = vunpack.c.h.b16 %v1595
        %v1757 = vunpack.c.l.b16 %v1596
        %v1758 = vunpack.c.h.b16 %v1596
        %v1759 = vunpack.c.l.b16 %v1597
        %v1760 = vunpack.c.h.b16 %v1597
        %v1761 = vunpack.c.l.b16 %v1598
        %v1762 = vunpack.c.h.b16 %v1598
        %v1763 = vunpack.c.l.b16 %v1599
        %v1764 = vunpack.c.h.b16 %v1599
        %v1765 = vunpack.c.l.b16 %v1600
        %v1766 = vunpack.c.h.b16 %v1600
        %v1767 = vunpack.c.l.b16 %v1601
        %v1768 = vunpack.c.h.b16 %v1601
        %v1769 = vunpack.c.l.b16 %v1602
        %v1770 = vunpack.c.h.b16 %v1602
        %v1771 = vunpack.c.l.b16 %v1603
        %v1772 = vunpack.c.h.b16 %v1603
        %v1773 = vunpack.c.l.b16 %v1604
        %v1774 = vunpack.c.h.b16 %v1604
        %v1775 = vunpack.c.l.b16 %v1605
        %v1776 = vunpack.c.h.b16 %v1605
        %v1777 = vunpack.c.l.b16 %v1606
        %v1778 = vunpack.c.h.b16 %v1606
        %v1779 = vunpack.c.l.b16 %v1607
        %v1780 = vunpack.c.h.b16 %v1607
        %v1781 = vunpack.c.l.b16 %v1608
        %v1782 = vunpack.c.h.b16 %v1608
        %v1783 = vunpack.c.l.b16 %v1609
        %v1784 = vunpack.c.h.b16 %v1609
        %v1785 = vunpack.c.l.b16 %v1610
        %v1786 = vunpack.c.h.b16 %v1610
        %v1787 = vunpack.c.l.b16 %v1611
        %v1788 = vunpack.c.h.b16 %v1611
        %v1789 = vunpack.c.l.b16 %v1612
        %v1790 = vunpack.c.h.b16 %v1612
        %v1791 = vunpack.c.l.b16 %v1613
        %v1792 = vunpack.c.h.b16 %v1613
        %v1793 = vunpack.c.l.b16 %v1614
        %v1794 = vunpack.c.h.b16 %v1614
        %v1795 = vunpack.c.l.b16 %v1615
        %v1796 = vunpack.c.h.b16 %v1615
        %v1797 = vunpack.c.l.b16 %v1616
        %v1798 = vunpack.c.h.b16 %v1616
        %v1799 = vunpack.c.l.b16 %v1617
        %v1800 = vunpack.c.h.b16 %v1617
        %v1801 = vunpack.c.l.b16 %v1618
        %v1802 = vunpack.c.h.b16 %v1618
        %v1803 = vunpack.c.l.b16 %v1619
        %v1804 = vunpack.c.h.b16 %v1619
        %v1805 = vunpack.c.l.b16 %v1620
        %v1806 = vunpack.c.h.b16 %v1620
        %v1807 = vunpack.c.l.b16 %v1621
        %v1808 = vunpack.c.h.b16 %v1621
        %v1809 = vunpack.c.l.b16 %v1622
        %v1810 = vunpack.c.h.b16 %v1622
        %v1811 = vunpack.c.l.b16 %v1623
        %v1812 = vunpack.c.h.b16 %v1623
        %v1813 = vunpack.c.l.b16 %v1624
        %v1814 = vunpack.c.h.b16 %v1624
        %v1815 = vunpack.c.l.b16 %v1625
        %v1816 = vunpack.c.h.b16 %v1625
        %v1817 = vunpack.c.l.b16 %v1626
        %v1818 = vunpack.c.h.b16 %v1626
        %v1819 = vunpack.c.l.b16 %v1627
        %v1820 = vunpack.c.h.b16 %v1627
        %v1821 = vunpack.c.l.b16 %v1628
        %v1822 = vunpack.c.h.b16 %v1628
        %v1823 = vunpack.c.l.b16 %v1629
        %v1824 = vunpack.c.h.b16 %v1629
        %v1825 = vunpack.c.l.b16 %v1630
        %v1826 = vunpack.c.h.b16 %v1630
        %v1827 = vunpack.c.l.b16 %v1631
        %v1828 = vunpack.c.h.b16 %v1631
        %v1829 = vunpack.c.l.b16 %v1632
        %v1830 = vunpack.c.h.b16 %v1632
        %v1831 = vunpack.c.l.b16 %v1633
        %v1832 = vunpack.c.h.b16 %v1633
        %v1833 = vunpack.c.l.b16 %v1634
        %v1834 = vunpack.c.h.b16 %v1634
        %v1835 = vunpack.c.l.b16 %v1635
        %v1836 = vunpack.c.h.b16 %v1635
        %v1837 = vunpack.c.l.b16 %v1636
        %v1838 = vunpack.c.h.b16 %v1636
        %v1839 = vunpack.c.l.b16 %v1637
        %v1840 = vunpack.c.h.b16 %v1637
        %v1841 = vunpack.c.l.b16 %v1638
        %v1842 = vunpack.c.h.b16 %v1638
        %v1843 = vpack.c.b16 %v1717, %v1715
        %v1844 = vpack.c.b16 %v1718, %v1716
        %v1845 = vpack.c.b16 %v1721, %v1719
        %v1846 = vpack.c.b16 %v1722, %v1720
        %v1847 = vpack.c.b16 %v1725, %v1723
        %v1848 = vpack.c.b16 %v1726, %v1724
        %v1849 = vpack.c.b16 %v1729, %v1727
        %v1850 = vpack.c.b16 %v1730, %v1728
        %v1851 = vpack.c.b16 %v1733, %v1731
        %v1852 = vpack.c.b16 %v1734, %v1732
        %v1853 = vpack.c.b16 %v1737, %v1735
        %v1854 = vpack.c.b16 %v1738, %v1736
        %v1855 = vpack.c.b16 %v1741, %v1739
        %v1856 = vpack.c.b16 %v1742, %v1740
        %v1857 = vpack.c.b16 %v1745, %v1743
        %v1858 = vpack.c.b16 %v1746, %v1744
        %v1859 = vpack.c.b16 %v1749, %v1747
        %v1860 = vpack.c.b16 %v1750, %v1748
        %v1861 = vpack.c.b16 %v1753, %v1751
        %v1862 = vpack.c.b16 %v1754, %v1752
        %v1863 = vpack.c.b16 %v1757, %v1755
        %v1864 = vpack.c.b16 %v1758, %v1756
        %v1865 = vpack.c.b16 %v1761, %v1759
        %v1866 = vpack.c.b16 %v1762, %v1760
        %v1867 = vpack.c.b16 %v1765, %v1763
        %v1868 = vpack.c.b16 %v1766, %v1764
        %v1869 = vpack.c.b16 %v1769, %v1767
        %v1870 = vpack.c.b16 %v1770, %v1768
        %v1871 = vpack.c.b16 %v1773, %v1771
        %v1872 = vpack.c.b16 %v1774, %v1772
        %v1873 = vpack.c.b16 %v1777, %v1775
        %v1874 = vpack.c.b16 %v1778, %v1776
        %v1875 = vpack.c.b16 %v1781, %v1779
        %v1876 = vpack.c.b16 %v1782, %v1780
        %v1877 = vpack.c.b16 %v1785, %v1783
        %v1878 = vpack.c.b16 %v1786, %v1784
        %v1879 = vpack.c.b16 %v1789, %v1787
        %v1880 = vpack.c.b16 %v1790, %v1788
        %v1881 = vpack.c.b16 %v1793, %v1791
        %v1882 = vpack.c.b16 %v1794, %v1792
        %v1883 = vpack.c.b16 %v1797, %v1795
        %v1884 = vpack.c.b16 %v1798, %v1796
        %v1885 = vpack.c.b16 %v1801, %v1799
        %v1886 = vpack.c.b16 %v1802, %v1800
        %v1887 = vpack.c.b16 %v1805, %v1803
        %v1888 = vpack.c.b16 %v1806, %v1804
        %v1889 = vpack.c.b16 %v1809, %v1807
        %v1890 = vpack.c.b16 %v1810, %v1808
        %v1891 = vpack.c.b16 %v1813, %v1811
        %v1892 = vpack.c.b16 %v1814, %v1812
        %v1893 = vpack.c.b16 %v1817, %v1815
        %v1894 = vpack.c.b16 %v1818, %v1816
        %v1895 = vpack.c.b16 %v1821, %v1819
        %v1896 = vpack.c.b16 %v1822, %v1820
        %v1897 = vpack.c.b16 %v1825, %v1823
        %v1898 = vpack.c.b16 %v1826, %v1824
        %v1899 = vpack.c.b16 %v1829, %v1827
        %v1900 = vpack.c.b16 %v1830, %v1828
        %v1901 = vpack.c.b16 %v1833, %v1831
        %v1902 = vpack.c.b16 %v1834, %v1832
        %v1903 = vpack.c.b16 %v1837, %v1835
        %v1904 = vpack.c.b16 %v1838, %v1836
        %v1905 = vpack.c.b16 %v1841, %v1839
        %v1906 = vpack.c.b16 %v1842, %v1840
        %1971 = vmatprep.subr.bf16.mxu0 %v1844
        %1972 = vmatpush1.bf16.msra.mxu0 %v1843
        %1973 = vmatprep.subr.bf16.mxu0 %v1846
        %1974 = vmatpush1.bf16.msra.mxu0 %v1845
        %1975 = vmatprep.subr.bf16.mxu0 %v1848
        %1976 = vmatpush1.bf16.msra.mxu0 %v1847
        %1977 = vmatprep.subr.bf16.mxu0 %v1850
        %1978 = vmatpush1.bf16.msra.mxu0 %v1849
        %1979 = vmatprep.subr.bf16.mxu0 %v1852
        %1980 = vmatpush1.bf16.msra.mxu0 %v1851
        %1981 = vmatprep.subr.bf16.mxu0 %v1854
        %1982 = vmatpush1.bf16.msra.mxu0 %v1853
        %1983 = vmatprep.subr.bf16.mxu0 %v1856
        %1984 = vmatpush1.bf16.msra.mxu0 %v1855
        %1985 = vmatprep.subr.bf16.mxu0 %v1858
        %1986 = vmatpush1.bf16.msra.mxu0 %v1857
        %1987 = vmatprep.subr.bf16.mxu0 %v1860
        %1988 = vmatpush1.bf16.msra.mxu0 %v1859
        %1989 = vmatprep.subr.bf16.mxu0 %v1862
        %1990 = vmatpush1.bf16.msra.mxu0 %v1861
        %1991 = vmatprep.subr.bf16.mxu0 %v1864
        %1992 = vmatpush1.bf16.msra.mxu0 %v1863
        %1993 = vmatprep.subr.bf16.mxu0 %v1866
        %1994 = vmatpush1.bf16.msra.mxu0 %v1865
        %1995 = vmatprep.subr.bf16.mxu0 %v1868
        %1996 = vmatpush1.bf16.msra.mxu0 %v1867
        %1997 = vmatprep.subr.bf16.mxu0 %v1870
        %1998 = vmatpush1.bf16.msra.mxu0 %v1869
        %1999 = vmatprep.subr.bf16.mxu0 %v1872
        %2000 = vmatpush1.bf16.msra.mxu0 %v1871
        %2001 = vmatprep.subr.bf16.mxu0 %v1874
        %2002 = vmatpush1.bf16.msra.mxu0 %v1873
        %2003 = vmatprep.mubr.bf16.mxu0 %v1572
        %2004 = vmatmul.mubr.bf16.gmra.mrb[0].mxu0 %v1571
        %v2005 = vpop.f32.mrb[0].mxu0
        %v2006 = vadd.f32 %v1644, %v2005
        %v2007 = vpop.f32.mrb[0].mxu0
        %v2008 = vadd.f32 %v1648, %v2007
        %v2009 = vpop.f32.mrb[0].mxu0
        %v2010 = vadd.f32 %v1644, %v2009
        %v2011 = vpop.f32.mrb[0].mxu0
        %v2012 = vadd.f32 %v1648, %v2011
        %2013 = vdwg.mxu0
        %2014 = vmatprep.subr.bf16.mxu0 %v1876
        %2015 = vmatpush1.bf16.msra.mxu0 %v1875
        %2016 = vmatprep.subr.bf16.mxu0 %v1878
        %2017 = vmatpush1.bf16.msra.mxu0 %v1877
        %2018 = vmatprep.subr.bf16.mxu0 %v1880
        %2019 = vmatpush1.bf16.msra.mxu0 %v1879
        %2020 = vmatprep.subr.bf16.mxu0 %v1882
        %2021 = vmatpush1.bf16.msra.mxu0 %v1881
        %2022 = vmatprep.subr.bf16.mxu0 %v1884
        %2023 = vmatpush1.bf16.msra.mxu0 %v1883
        %2024 = vmatprep.subr.bf16.mxu0 %v1886
        %2025 = vmatpush1.bf16.msra.mxu0 %v1885
        %2026 = vmatprep.subr.bf16.mxu0 %v1888
        %2027 = vmatpush1.bf16.msra.mxu0 %v1887
        %2028 = vmatprep.subr.bf16.mxu0 %v1890
        %2029 = vmatpush1.bf16.msra.mxu0 %v1889
        %2030 = vmatprep.subr.bf16.mxu0 %v1892
        %2031 = vmatpush1.bf16.msra.mxu0 %v1891
        %2032 = vmatprep.subr.bf16.mxu0 %v1894
        %2033 = vmatpush1.bf16.msra.mxu0 %v1893
        %2034 = vmatprep.subr.bf16.mxu0 %v1896
        %2035 = vmatpush1.bf16.msra.mxu0 %v1895
        %2036 = vmatprep.subr.bf16.mxu0 %v1898
        %2037 = vmatpush1.bf16.msra.mxu0 %v1897
        %2038 = vmatprep.subr.bf16.mxu0 %v1900
        %2039 = vmatpush1.bf16.msra.mxu0 %v1899
        %2040 = vmatprep.subr.bf16.mxu0 %v1902
        %2041 = vmatpush1.bf16.msra.mxu0 %v1901
        %2042 = vmatprep.subr.bf16.mxu0 %v1904
        %2043 = vmatpush1.bf16.msra.mxu0 %v1903
        %2044 = vmatprep.subr.bf16.mxu0 %v1906
        %2045 = vmatpush1.bf16.msra.mxu0 %v1905
        %2046 = vmatprep.mubr.bf16.mxu0 %v1574
        %2047 = vmatmul.mubr.bf16.gmra.mrb[0].mxu0 %v1573
        %v2048 = vpop.f32.mrb[0].mxu0
        %v2049 = vadd.f32 %v2006, %v2048
        %v2050 = vpop.f32.mrb[0].mxu0
        %v2051 = vadd.f32 %v2008, %v2050
        %v2052 = vpop.f32.mrb[0].mxu0
        %v2053 = vadd.f32 %v2010, %v2052
        %v2054 = vpop.f32.mrb[0].mxu0
        %v2055 = vadd.f32 %v2012, %v2054
        %2056 = vdwg.mxu0
        %v2057 = vadd.f32 %v2049, %v1065
        %v2058 = vadd.f32 %v2051, %v1066
        %v2059 = vadd.f32 %v2053, %v1067
        %v2060 = vadd.f32 %v2055, %v1068
        %v2061 = vld [vmem:[%s8] sm:$0x3]
        %v2062 = vld [vmem:[%s9] sm:$0x3]
        %v2063 = vadd.f32 %v2057, %v2058
        %2064 = vadd.xlane.f32.xlu0 %v2063
        %v2065 = vpop.xlane.xlu0 %2064
        %v2066 = vadd.f32 %v2059, %v2060
        %2067 = vadd.xlane.f32.xlu0 %v2066
        %v2068 = vpop.xlane.xlu0 %2067
        %v2069 = vmul.f32 %v2065, %v998
        %v2070 = vmul.f32 %v2068, %v998
        %v2071 = vsub.f32 %v2057, %v2069
        %v2072 = vsub.f32 %v2058, %v2069
        %v2073 = vsub.f32 %v2059, %v2070
        %v2074 = vsub.f32 %v2060, %v2070
        %v2075 = vmul.f32 %v2071, %v2071
        %v2076 = vmul.f32 %v2072, %v2072
        %v2077 = vmul.f32 %v2073, %v2073
        %v2078 = vmul.f32 %v2074, %v2074
        %v2079 = vadd.f32 %v2075, %v2076
        %2080 = vadd.xlane.f32.xlu0 %v2079
        %v2081 = vpop.xlane.xlu0 %2080
        %v2082 = vadd.f32 %v2077, %v2078
        %2083 = vadd.xlane.f32.xlu0 %v2082
        %v2084 = vpop.xlane.xlu0 %2083
        %v2085 = vmul.f32 %v2081, 0.003921569
        %v2086 = vmul.f32 %v2084, 0.003921569
        %v2087 = vrsqrt.pop %v2085
        %v2088 = vmul.f32 %v2085, %v2087
        %vm2089 = vcmp.eq.f32.partialorder %v2085, inf
        %v2090 = vsel %vm2089, %v2085, %v2088
        %vm2091 = vcmp.eq.f32.partialorder %v2085, 0.0
        %v2092 = vand.u32 %v2085, 2147483648
        %v2093 = vsel %vm2091, %v2092, %v2090
        %v2094 = vrsqrt.pop %v2086
        %v2095 = vmul.f32 %v2086, %v2094
        %vm2096 = vcmp.eq.f32.partialorder %v2086, inf
        %v2097 = vsel %vm2096, %v2086, %v2095
        %vm2098 = vcmp.eq.f32.partialorder %v2086, 0.0
        %v2099 = vand.u32 %v2086, 2147483648
        %v2100 = vsel %vm2098, %v2099, %v2097
        %v2101 = vadd.f32 %v2093, 1e-06
        %v2102 = vadd.f32 %v2100, 1e-06
        %v2103 = vrcp.pop %v2101
        %v2104 = vrcp.pop %v2102
        %v2105 = vmul.f32 %v2071, %v2103
        %v2106 = vmul.f32 %v2072, %v2103
        %v2107 = vmul.f32 %v2073, %v2104
        %v2108 = vmul.f32 %v2074, %v2104
        %v2110 = vlaneseq
        %v2111 = vshrl.u32 %v2110, 7
        %v2112 = vsub.s32 0, %v2111
        %v2113 = vrot.slane %v2061, %v2112
        %v2114 = vlaneseq
        %v2115 = vshrl.u32 %v2114, 7
        %v2116 = vsub.s32 1, %v2115
        %v2117 = vrot.slane %v2061, %v2116
        %v2120 = vmul.f32 %v2113, %v2105
        %v2121 = vmul.f32 %v2117, %v2106
        %v2122 = vmul.f32 %v2113, %v2107
        %v2123 = vmul.f32 %v2117, %v2108
        %v2125 = vlaneseq
        %v2126 = vshrl.u32 %v2125, 7
        %v2127 = vsub.s32 0, %v2126
        %v2128 = vrot.slane %v2062, %v2127
        %v2129 = vlaneseq
        %v2130 = vshrl.u32 %v2129, 7
        %v2131 = vsub.s32 1, %v2130
        %v2132 = vrot.slane %v2062, %v2131
        %v2135 = vadd.f32 %v2120, %v2128
        %v2136 = vadd.f32 %v2121, %v2132
        %v2137 = vadd.f32 %v2122, %v2128
        %v2138 = vadd.f32 %v2123, %v2132
        %v2139 = vadd.f32 %v2135, %v1065
        %v2140 = vadd.f32 %v2136, %v1066
        %v2141 = vadd.f32 %v2137, %v1067
        %v2142 = vadd.f32 %v2138, %v1068
        %v2143 = vld [vmem:[%s10] sm:$0x3]
        %v2144 = vld [vmem:[%s11] sm:$0x3]
        %v2145 = vadd.f32 %v2139, %v2140
        %2146 = vadd.xlane.f32.xlu0 %v2145
        %v2147 = vpop.xlane.xlu0 %2146
        %v2148 = vadd.f32 %v2141, %v2142
        %2149 = vadd.xlane.f32.xlu0 %v2148
        %v2150 = vpop.xlane.xlu0 %2149
        %v2151 = vmul.f32 %v2147, %v998
        %v2152 = vmul.f32 %v2150, %v998
        %v2153 = vsub.f32 %v2139, %v2151
        %v2154 = vsub.f32 %v2140, %v2151
        %v2155 = vsub.f32 %v2141, %v2152
        %v2156 = vsub.f32 %v2142, %v2152
        %v2157 = vmul.f32 %v2153, %v2153
        %v2158 = vmul.f32 %v2154, %v2154
        %v2159 = vmul.f32 %v2155, %v2155
        %v2160 = vmul.f32 %v2156, %v2156
        %v2161 = vadd.f32 %v2157, %v2158
        %2162 = vadd.xlane.f32.xlu0 %v2161
        %v2163 = vpop.xlane.xlu0 %2162
        %v2164 = vadd.f32 %v2159, %v2160
        %2165 = vadd.xlane.f32.xlu0 %v2164
        %v2166 = vpop.xlane.xlu0 %2165
        %v2167 = vmul.f32 %v2163, 0.003921569
        %v2168 = vmul.f32 %v2166, 0.003921569
        %v2169 = vrsqrt.pop %v2167
        %v2170 = vmul.f32 %v2167, %v2169
        %vm2171 = vcmp.eq.f32.partialorder %v2167, inf
        %v2172 = vsel %vm2171, %v2167, %v2170
        %vm2173 = vcmp.eq.f32.partialorder %v2167, 0.0
        %v2174 = vand.u32 %v2167, 2147483648
        %v2175 = vsel %vm2173, %v2174, %v2172
        %v2176 = vrsqrt.pop %v2168
        %v2177 = vmul.f32 %v2168, %v2176
        %vm2178 = vcmp.eq.f32.partialorder %v2168, inf
        %v2179 = vsel %vm2178, %v2168, %v2177
        %vm2180 = vcmp.eq.f32.partialorder %v2168, 0.0
        %v2181 = vand.u32 %v2168, 2147483648
        %v2182 = vsel %vm2180, %v2181, %v2179
        %v2183 = vadd.f32 %v2175, 1e-06
        %v2184 = vadd.f32 %v2182, 1e-06
        %v2185 = vrcp.pop %v2183
        %v2186 = vrcp.pop %v2184
        %v2187 = vmul.f32 %v2153, %v2185
        %v2188 = vmul.f32 %v2154, %v2185
        %v2189 = vmul.f32 %v2155, %v2186
        %v2190 = vmul.f32 %v2156, %v2186
        %v2192 = vlaneseq
        %v2193 = vshrl.u32 %v2192, 7
        %v2194 = vsub.s32 0, %v2193
        %v2195 = vrot.slane %v2143, %v2194
        %v2196 = vlaneseq
        %v2197 = vshrl.u32 %v2196, 7
        %v2198 = vsub.s32 1, %v2197
        %v2199 = vrot.slane %v2143, %v2198
        %v2202 = vmul.f32 %v2195, %v2187
        %v2203 = vmul.f32 %v2199, %v2188
        %v2204 = vmul.f32 %v2195, %v2189
        %v2205 = vmul.f32 %v2199, %v2190
        %v2207 = vlaneseq
        %v2208 = vshrl.u32 %v2207, 7
        %v2209 = vsub.s32 0, %v2208
        %v2210 = vrot.slane %v2144, %v2209
        %v2211 = vlaneseq
        %v2212 = vshrl.u32 %v2211, 7
        %v2213 = vsub.s32 1, %v2212
        %v2214 = vrot.slane %v2144, %v2213
        %v2217 = vadd.f32 %v2202, %v2210
        %v2218 = vadd.f32 %v2203, %v2214
        %v2219 = vadd.f32 %v2204, %v2210
        %v2220 = vadd.f32 %v2205, %v2214
        %2221 = vst [vmem:[%s475] sm:$0xff] %v2217
        %2222 = vst [vmem:[%s475 + $0x8] sm:$0xff] %v2218
        %2223 = vst [vmem:[%s475 + $0x10] sm:$0xff] %v2219
        %2224 = vst [vmem:[%s475 + $0x18] sm:$0xff] %v2220
        %s2225 = sand.u32 %s296, 1
        %s2226 = scalar_lea.sflag [#allocation4], %s2225
        %s2227 = sand.u32 %s296, 1
        %s2228 = smul.addr %s2227, 32
        %s2229 = scalar_lea.vmem [#allocation10], %s2228
        // Predicated region
        $region85: #{encoder_layer_forward.1} parent=67 // pred_check
          %p2230 = pneg %p306
        $region86: #{encoder_layer_forward.1} parent=67 // pred_check_branch
          %2232 = sbr.rel (%p2230) target = $region88
        $region87: #{encoder_layer_forward.1} parent=67 // pred_region
          %s2234 = ssub.s32 512, 512
          %2235 = vsyncadd %s2226, %s2234
          %s2236 = smul.addr %s31, 4
          %s2237 = smul.addr %s2236, 128
          %s2238 = scalar_lea.hbm %s12, %s2237
          %s2239 = sshll.u32 %s2229, 4
          %s2240 = int_to_ptr.vmem [resolvable:$true] %s2239
          %2245 = dma.vmem_to_hbm [thread:$0]  %s2240, 512, %s2238, %s2226, 256, 256, 16
        $region88: #{encoder_layer_forward.1} parent=67 // pred_fallthru
          _
      $region68: #{encoder_layer_forward.1} parent=5 // pred_fallthru
        _
      %p2246 = scmp.le.s32.totalorder 2, %s26
      // Predicated region
      $region89: #{encoder_layer_forward.1} parent=5 // pred_check
        %p2247 = pneg %p2246
      $region90: #{encoder_layer_forward.1} parent=5 // pred_check_branch
        %2249 = sbr.rel (%p2247) target = $region92
      $region91: #{encoder_layer_forward.1} parent=5 // pred_region
        %s2250 = ssub.s32 %s26, 2
        // Predicated region
        $region93: #{encoder_layer_forward.1} parent=91 // pred_check
          %p2251 = pneg %p312
        $region94: #{encoder_layer_forward.1} parent=91 // pred_check_branch
          %2253 = sbr.rel (%p2251) target = $region96
        $region95: #{encoder_layer_forward.1} parent=91 // pred_region
          %s2254 = sand.u32 %s297, 1
          %s2255 = scalar_lea.sflag [#allocation4], %s2254
          %s2256 = sand.u32 %s297, 1
          %s2257 = smul.addr %s2256, 32
          %s2258 = scalar_lea.vmem [#allocation10], %s2257
          %2259 = dma.done %s2255, 512
        $region96: #{encoder_layer_forward.1} parent=91 // pred_fallthru
          _
      $region92: #{encoder_layer_forward.1} parent=5 // pred_fallthru
        _
    $region6: #{encoder_layer_forward.1} parent=1 // loop_footer
      %s30 = sadd.s32 1, %s26
    $region7: #{encoder_layer_forward.1} parent=1 // loop_footer_branch
      %25 = sbr.rel target = $region3
    $region8: #{encoder_layer_forward.1} parent=1 // loop_exit
      _
    %2260 = vsyncpa [#allocation3], 1
    %s2261 = scalar_lea.sflag [#allocation3], 1
    %2262 = vsyncpa %s2261, 1
    %2263 = vsyncpa [#allocation6], 1
    %2264 = vsyncpa [#allocation9], 1
    %2265 = vsyncpa [#allocation4], 1
    %s2266 = scalar_lea.sflag [#allocation4], 1
    %2267 = vsyncpa %s2266, 1

</llo_original>
